<compile_context>
chip_gen: v7x
topology: tpu7x:2x2x1
jax: 0.10.0
libtpu: 0.0.40
codegen_flags: <defaults>
</compile_context>

<pallas_src>
import jax
import jax.numpy as jnp
from jax.experimental import pallas as pl
from jax.experimental.pallas import tpu as pltpu

LAYER_NORM_EPS = 1e-12
_NFLIGHT = 8  # number of word-row gather DMAs kept in flight


def _make_kernel(tile_n, hidden, k_pad, off_y, off_h, off_w, off_pos,
                 off_type, eps):
    inv_h = 1.0 / float(hidden)
    k0 = min(_NFLIGHT, tile_n)

    def kernel(ids_ref,              # (N_pad,) int32 in SMEM (scalar prefetch)
               packed_ref,           # (tile_n, 8) int32: [pos, typ, x0, y0, x1, y1, 0, 0]
               word_hbm,             # (V, H) f32 in HBM (ANY) — row-gathered by DMA
               fused_ref,            # (k_pad, H) f32, VMEM-resident fused small tables
               gamma_ref, beta_ref,  # (1, H) f32
               out_ref,              # (tile_n, H) f32
               word_buf,             # scratch VMEM (tile_n, H) f32
               dma_sems):            # DMA semaphores (_NFLIGHT,)
        base = pl.program_id(0) * tile_n

        def row_copy(t):
            idx = ids_ref[base + t]
            return pltpu.make_async_copy(
                word_hbm.at[pl.ds(idx, 1)],
                word_buf.at[pl.ds(t, 1)],
                dma_sems.at[t % _NFLIGHT])

        # Prime the row-gather pipeline with k0 outstanding DMAs.
        for t in range(k0):
            row_copy(t).start()

        @pl.loop(0, tile_n)
        def _(t):
            row_copy(t).wait()
            nxt = t + k0

            @pl.when(nxt < tile_n)
            def _():
                row_copy(nxt).start()

        packed = packed_ref[...]
        pos = packed[:, 0:1]
        typ = packed[:, 1:2]
        x0 = packed[:, 2:3]
        y0 = packed[:, 3:4]
        x1 = packed[:, 4:5]
        y1 = packed[:, 5:6]

        # One multi-hot matrix covering x/y/h/w/pos/type blocks of the fused
        # table -> a single MXU matmul instead of eight separate gathers.
        iota = jax.lax.broadcasted_iota(jnp.int32, (tile_n, k_pad), 1)

        def onehot(col):
            return (iota == col).astype(jnp.float32)

        multihot = (onehot(x0) + onehot(x1)                       # left, right
                    + onehot(y0 + off_y) + onehot(y1 + off_y)     # upper, lower
                    + onehot((y1 - y0) + off_h)                   # height
                    + onehot((x1 - x0) + off_w)                   # width
                    + onehot(pos + off_pos)                       # position
                    + onehot(typ + off_type))                     # token type

        emb = jnp.dot(multihot, fused_ref[...],
                      preferred_element_type=jnp.float32)
        emb = emb + word_buf[...]                                 # DMA-gathered word rows

        # LayerNorm over the hidden axis (BertLayerNorm semantics).
        mean = jnp.sum(emb, axis=-1, keepdims=True) * inv_h
        centered = emb - mean
        var = jnp.sum(centered * centered, axis=-1, keepdims=True) * inv_h
        normed = centered * jax.lax.rsqrt(var + eps)
        out_ref[...] = normed * gamma_ref[...] + beta_ref[...]
        # TODO(synk): dropout is a no-op here (inference mode); training-mode
        # dropout would need pltpu.prng_random_bits + masking.

    return kernel


def layoutlm_embeddings(input_ids, bbox, params,
                        token_type_ids=None, position_ids=None,
                        eps=LAYER_NORM_EPS, tile_n=256):
    """Pallas implementation of LayoutlmEmbeddings.forward.

    input_ids: (B, S) int32
    bbox:      (B, S, 4) int32, columns = [x0, y0, x1, y1]
    returns:   (B, S, H) float32
    """
    B, S = input_ids.shape
    H = params["word"].shape[1]
    m2d = params["x"].shape[0]
    max_pos = params["pos"].shape[0]
    N = B * S

    if position_ids is None:
        position_ids = jnp.broadcast_to(
            jnp.arange(S, dtype=jnp.int32)[None, :], (B, S))
    if token_type_ids is None:
        token_type_ids = jnp.zeros_like(input_ids)

    # Token tile size: multiple of 8, no larger than (padded) N.
    tile_n = int(min(tile_n, pl.cdiv(N, 8) * 8))
    tile_n = max(8, (tile_n // 8) * 8)
    num_tiles = int(pl.cdiv(N, tile_n))
    n_pad = num_tiles * tile_n

    ids_f = jnp.pad(input_ids.reshape(N).astype(jnp.int32), (0, n_pad - N))
    packed = jnp.concatenate([
        position_ids.reshape(N, 1),
        token_type_ids.reshape(N, 1),
        bbox.reshape(N, 4),
        jnp.zeros((N, 2), jnp.int32),
    ], axis=1).astype(jnp.int32)
    packed = jnp.pad(packed, ((0, n_pad - N), (0, 0)))

    # Fused small tables: [x | y | h | w | pos | type], padded to 128-row multiple.
    fused = jnp.concatenate(
        [params["x"], params["y"], params["h"], params["w"],
         params["pos"], params["type"]], axis=0).astype(jnp.float32)
    k_raw = fused.shape[0]
    k_pad = int(pl.cdiv(k_raw, 128) * 128)
    fused = jnp.pad(fused, ((0, k_pad - k_raw), (0, 0)))

    off_y = m2d
    off_h = 2 * m2d
    off_w = 3 * m2d
    off_pos = 4 * m2d
    off_type = 4 * m2d + max_pos

    kernel = _make_kernel(tile_n, H, k_pad, off_y, off_h, off_w,
                          off_pos, off_type, eps)

    out = pl.pallas_call(
        kernel,
        out_shape=jax.ShapeDtypeStruct((n_pad, H), jnp.float32),
        grid_spec=pltpu.PrefetchScalarGridSpec(
            num_scalar_prefetch=1,
            grid=(num_tiles,),
            in_specs=[
                pl.BlockSpec((tile_n, 8), lambda i, ids: (i, 0)),   # packed ids
                pl.BlockSpec(memory_space=pl.ANY),                  # word table (HBM)
                pl.BlockSpec((k_pad, H), lambda i, ids: (0, 0)),    # fused table (resident)
                pl.BlockSpec((1, H), lambda i, ids: (0, 0)),        # gamma
                pl.BlockSpec((1, H), lambda i, ids: (0, 0)),        # beta
            ],
            out_specs=pl.BlockSpec((tile_n, H), lambda i, ids: (i, 0)),
            scratch_shapes=[
                pltpu.VMEM((tile_n, H), jnp.float32),
                pltpu.SemaphoreType.DMA((_NFLIGHT,)),
            ],
        ),
        compiler_params=pltpu.CompilerParams(
            dimension_semantics=("parallel",),
            vmem_limit_bytes=64 * 1024 * 1024,
        ),
    )(ids_f, packed, params["word"].astype(jnp.float32), fused,
      params["gamma"].reshape(1, H), params["beta"].reshape(1, H))

    return out[:N].reshape(B, S, H)


def init_params(key, vocab_size, hidden_size, max_position_embeddings,
                max_2d_position_embeddings, type_vocab_size):
    ks = jax.random.split(key, 9)

    def tbl(k, n):
        return (0.02 * jax.random.normal(k, (n, hidden_size))).astype(jnp.float32)

    word = tbl(ks[0], vocab_size)
    # nn.Embedding(padding_idx=0): row 0 is zero.
    word = word.at[0].set(0.0)
    return {
        "word": word,
        "pos": tbl(ks[1], max_position_embeddings),
        "x": tbl(ks[2], max_2d_position_embeddings),
        "y": tbl(ks[3], max_2d_position_embeddings),
        "h": tbl(ks[4], max_2d_position_embeddings),
        "w": tbl(ks[5], max_2d_position_embeddings),
        "type": tbl(ks[6], type_vocab_size),
        "gamma": jnp.ones((1, hidden_size), jnp.float32),
        "beta": jnp.zeros((1, hidden_size), jnp.float32),
    }


def _reference(input_ids, bbox, params, eps=LAYER_NORM_EPS):
    B, S = input_ids.shape
    position_ids = jnp.broadcast_to(jnp.arange(S, dtype=jnp.int32)[None, :], (B, S))
    token_type_ids = jnp.zeros_like(input_ids)
    emb = (jnp.take(params["word"], input_ids, axis=0)
           + jnp.take(params["pos"], position_ids, axis=0)
           + jnp.take(params["x"], bbox[:, :, 0], axis=0)
           + jnp.take(params["y"], bbox[:, :, 1], axis=0)
           + jnp.take(params["x"], bbox[:, :, 2], axis=0)
           + jnp.take(params["y"], bbox[:, :, 3], axis=0)
           + jnp.take(params["h"], bbox[:, :, 3] - bbox[:, :, 1], axis=0)
           + jnp.take(params["w"], bbox[:, :, 2] - bbox[:, :, 0], axis=0)
           + jnp.take(params["type"], token_type_ids, axis=0))
    mean = jnp.mean(emb, axis=-1, keepdims=True)
    var = jnp.mean((emb - mean) ** 2, axis=-1, keepdims=True)
    return (emb - mean) * jax.lax.rsqrt(var + eps) * params["gamma"] + params["beta"]


if __name__ == "__main__":
    # Small synthetic config (real LayoutLM: vocab=30522, H=768, max_2d=1024).
    B, S, H = 2, 8, 32
    VOCAB, MAX_POS, MAX_2D, TYPES = 64, 16, 128, 2

    key = jax.random.PRNGKey(0)
    k_param, k_ids, k_x, k_y, k_w, k_h = jax.random.split(key, 6)

    params = init_params(k_param, VOCAB, H, MAX_POS, MAX_2D, TYPES)

    input_ids = jax.random.randint(k_ids, (B, S), 0, VOCAB, dtype=jnp.int32)
    # bbox: x0 <= x1, y0 <= y1, all coords (and diffs) within [0, MAX_2D).
    x0 = jax.random.randint(k_x, (B, S), 0, MAX_2D // 2, dtype=jnp.int32)
    y0 = jax.random.randint(k_y, (B, S), 0, MAX_2D // 2, dtype=jnp.int32)
    w = jax.random.randint(k_w, (B, S), 0, MAX_2D // 2, dtype=jnp.int32)
    h = jax.random.randint(k_h, (B, S), 0, MAX_2D // 2, dtype=jnp.int32)
    bbox = jnp.stack([x0, y0, x0 + w, y0 + h], axis=-1)  # (B, S, 4)

    # tile_n=8 so the small test actually exercises multiple grid steps.
    out = layoutlm_embeddings(input_ids, bbox, params, tile_n=8)
    out = jax.block_until_ready(out)

    ref = _reference(input_ids, bbox, params)
    assert out.shape == (B, S, H)
    assert jnp.allclose(out, ref, atol=2e-4, rtol=2e-4), "mismatch vs reference"

    print("KERNEL_OK")
</pallas_src>

<mosaic_0001>
module attributes {stable_mosaic.version = 11 : i64} {
  func.func @kernel(%arg0: i32, %arg1: memref<16xi32, #tpu.memory_space<smem>>, %arg2: memref<8x8xi32, #tpu.memory_space<vmem>>, %arg3: memref<64x32xf32, #tpu.memory_space<any>>, %arg4: memref<640x32xf32, #tpu.memory_space<vmem>>, %arg5: memref<1x32xf32, #tpu.memory_space<vmem>>, %arg6: memref<1x32xf32, #tpu.memory_space<vmem>>, %arg7: memref<8x32xf32, #tpu.memory_space<vmem>>, %arg8: memref<8x32xf32, #tpu.memory_space<vmem>>, %arg9: memref<8x!tpu.dma_semaphore, #tpu.memory_space<semaphore_mem>>) attributes {dimension_semantics = [#tpu.dimension_semantics<parallel>], iteration_bounds = array<i64: 2>, scalar_prefetch = 1 : i64, scratch_operands = 2 : i64, tpu.core_type = #tpu.core_type<tc>, window_params = [{transform_indices = @transform_0, window_bounds = array<i64: 8, 8>}, {}, {pipeline_mode = #tpu.pipeline_mode<synchronous>, transform_indices = @transform_2, window_bounds = array<i64: 640, 32>}, {pipeline_mode = #tpu.pipeline_mode<synchronous>, transform_indices = @transform_3, window_bounds = array<i64: 1, 32>}, {pipeline_mode = #tpu.pipeline_mode<synchronous>, transform_indices = @transform_4, window_bounds = array<i64: 1, 32>}, {transform_indices = @transform_5, window_bounds = array<i64: 8, 32>}]} {
    %c8_i32 = arith.constant 8 : i32
    %0 = arith.muli %arg0, %c8_i32 : i32
    %c0_i32 = arith.constant 0 : i32
    %1 = arith.addi %0, %c0_i32 : i32
    %2 = arith.index_cast %1 : i32 to index
    %3 = memref.load %arg1[%2] : memref<16xi32, #tpu.memory_space<smem>>
    %c0_i32_0 = arith.constant 0 : i32
    %c0_i32_1 = arith.constant 0 : i32
    %4 = tpu.memref_slice %arg3[%3, %c0_i32_1] : memref<64x32xf32, #tpu.memory_space<any>> -> memref<1x32xf32, #tpu.memory_space<any>>
    %c0_i32_2 = arith.constant 0 : i32
    %c0_i32_3 = arith.constant 0 : i32
    %5 = tpu.memref_slice %arg8[%c0_i32_2, %c0_i32_3] : memref<8x32xf32, #tpu.memory_space<vmem>> -> memref<1x32xf32, #tpu.memory_space<vmem>>
    %6 = tpu.memref_slice %arg9[%c0_i32_0] : memref<8x!tpu.dma_semaphore, #tpu.memory_space<semaphore_mem>> -> memref<1x!tpu.dma_semaphore, #tpu.memory_space<semaphore_mem>>
    %7 = tpu.memref_squeeze %6 : memref<1x!tpu.dma_semaphore, #tpu.memory_space<semaphore_mem>> -> memref<!tpu.dma_semaphore, #tpu.memory_space<semaphore_mem>>
    tpu.enqueue_dma source(%4 : memref<1x32xf32, #tpu.memory_space<any>>) target(%5 : memref<1x32xf32, #tpu.memory_space<vmem>>) target_semaphore(%7 : memref<!tpu.dma_semaphore, #tpu.memory_space<semaphore_mem>>)
    %c1_i32 = arith.constant 1 : i32
    %8 = arith.addi %0, %c1_i32 : i32
    %9 = arith.index_cast %8 : i32 to index
    %10 = memref.load %arg1[%9] : memref<16xi32, #tpu.memory_space<smem>>
    %c1_i32_4 = arith.constant 1 : i32
    %c0_i32_5 = arith.constant 0 : i32
    %11 = tpu.memref_slice %arg3[%10, %c0_i32_5] : memref<64x32xf32, #tpu.memory_space<any>> -> memref<1x32xf32, #tpu.memory_space<any>>
    %c1_i32_6 = arith.constant 1 : i32
    %c0_i32_7 = arith.constant 0 : i32
    %12 = tpu.memref_slice %arg8[%c1_i32_6, %c0_i32_7] : memref<8x32xf32, #tpu.memory_space<vmem>> -> memref<1x32xf32, #tpu.memory_space<vmem>>
    %13 = tpu.memref_slice %arg9[%c1_i32_4] : memref<8x!tpu.dma_semaphore, #tpu.memory_space<semaphore_mem>> -> memref<1x!tpu.dma_semaphore, #tpu.memory_space<semaphore_mem>>
    %14 = tpu.memref_squeeze %13 : memref<1x!tpu.dma_semaphore, #tpu.memory_space<semaphore_mem>> -> memref<!tpu.dma_semaphore, #tpu.memory_space<semaphore_mem>>
    tpu.enqueue_dma source(%11 : memref<1x32xf32, #tpu.memory_space<any>>) target(%12 : memref<1x32xf32, #tpu.memory_space<vmem>>) target_semaphore(%14 : memref<!tpu.dma_semaphore, #tpu.memory_space<semaphore_mem>>)
    %c2_i32 = arith.constant 2 : i32
    %15 = arith.addi %0, %c2_i32 : i32
    %16 = arith.index_cast %15 : i32 to index
    %17 = memref.load %arg1[%16] : memref<16xi32, #tpu.memory_space<smem>>
    %c2_i32_8 = arith.constant 2 : i32
    %c0_i32_9 = arith.constant 0 : i32
    %18 = tpu.memref_slice %arg3[%17, %c0_i32_9] : memref<64x32xf32, #tpu.memory_space<any>> -> memref<1x32xf32, #tpu.memory_space<any>>
    %c2_i32_10 = arith.constant 2 : i32
    %c0_i32_11 = arith.constant 0 : i32
    %19 = tpu.memref_slice %arg8[%c2_i32_10, %c0_i32_11] : memref<8x32xf32, #tpu.memory_space<vmem>> -> memref<1x32xf32, #tpu.memory_space<vmem>>
    %20 = tpu.memref_slice %arg9[%c2_i32_8] : memref<8x!tpu.dma_semaphore, #tpu.memory_space<semaphore_mem>> -> memref<1x!tpu.dma_semaphore, #tpu.memory_space<semaphore_mem>>
    %21 = tpu.memref_squeeze %20 : memref<1x!tpu.dma_semaphore, #tpu.memory_space<semaphore_mem>> -> memref<!tpu.dma_semaphore, #tpu.memory_space<semaphore_mem>>
    tpu.enqueue_dma source(%18 : memref<1x32xf32, #tpu.memory_space<any>>) target(%19 : memref<1x32xf32, #tpu.memory_space<vmem>>) target_semaphore(%21 : memref<!tpu.dma_semaphore, #tpu.memory_space<semaphore_mem>>)
    %c3_i32 = arith.constant 3 : i32
    %22 = arith.addi %0, %c3_i32 : i32
    %23 = arith.index_cast %22 : i32 to index
    %24 = memref.load %arg1[%23] : memref<16xi32, #tpu.memory_space<smem>>
    %c3_i32_12 = arith.constant 3 : i32
    %c0_i32_13 = arith.constant 0 : i32
    %25 = tpu.memref_slice %arg3[%24, %c0_i32_13] : memref<64x32xf32, #tpu.memory_space<any>> -> memref<1x32xf32, #tpu.memory_space<any>>
    %c3_i32_14 = arith.constant 3 : i32
    %c0_i32_15 = arith.constant 0 : i32
    %26 = tpu.memref_slice %arg8[%c3_i32_14, %c0_i32_15] : memref<8x32xf32, #tpu.memory_space<vmem>> -> memref<1x32xf32, #tpu.memory_space<vmem>>
    %27 = tpu.memref_slice %arg9[%c3_i32_12] : memref<8x!tpu.dma_semaphore, #tpu.memory_space<semaphore_mem>> -> memref<1x!tpu.dma_semaphore, #tpu.memory_space<semaphore_mem>>
    %28 = tpu.memref_squeeze %27 : memref<1x!tpu.dma_semaphore, #tpu.memory_space<semaphore_mem>> -> memref<!tpu.dma_semaphore, #tpu.memory_space<semaphore_mem>>
    tpu.enqueue_dma source(%25 : memref<1x32xf32, #tpu.memory_space<any>>) target(%26 : memref<1x32xf32, #tpu.memory_space<vmem>>) target_semaphore(%28 : memref<!tpu.dma_semaphore, #tpu.memory_space<semaphore_mem>>)
    %c4_i32 = arith.constant 4 : i32
    %29 = arith.addi %0, %c4_i32 : i32
    %30 = arith.index_cast %29 : i32 to index
    %31 = memref.load %arg1[%30] : memref<16xi32, #tpu.memory_space<smem>>
    %c4_i32_16 = arith.constant 4 : i32
    %c0_i32_17 = arith.constant 0 : i32
    %32 = tpu.memref_slice %arg3[%31, %c0_i32_17] : memref<64x32xf32, #tpu.memory_space<any>> -> memref<1x32xf32, #tpu.memory_space<any>>
    %c4_i32_18 = arith.constant 4 : i32
    %c0_i32_19 = arith.constant 0 : i32
    %33 = tpu.memref_slice %arg8[%c4_i32_18, %c0_i32_19] : memref<8x32xf32, #tpu.memory_space<vmem>> -> memref<1x32xf32, #tpu.memory_space<vmem>>
    %34 = tpu.memref_slice %arg9[%c4_i32_16] : memref<8x!tpu.dma_semaphore, #tpu.memory_space<semaphore_mem>> -> memref<1x!tpu.dma_semaphore, #tpu.memory_space<semaphore_mem>>
    %35 = tpu.memref_squeeze %34 : memref<1x!tpu.dma_semaphore, #tpu.memory_space<semaphore_mem>> -> memref<!tpu.dma_semaphore, #tpu.memory_space<semaphore_mem>>
    tpu.enqueue_dma source(%32 : memref<1x32xf32, #tpu.memory_space<any>>) target(%33 : memref<1x32xf32, #tpu.memory_space<vmem>>) target_semaphore(%35 : memref<!tpu.dma_semaphore, #tpu.memory_space<semaphore_mem>>)
    %c5_i32 = arith.constant 5 : i32
    %36 = arith.addi %0, %c5_i32 : i32
    %37 = arith.index_cast %36 : i32 to index
    %38 = memref.load %arg1[%37] : memref<16xi32, #tpu.memory_space<smem>>
    %c5_i32_20 = arith.constant 5 : i32
    %c0_i32_21 = arith.constant 0 : i32
    %39 = tpu.memref_slice %arg3[%38, %c0_i32_21] : memref<64x32xf32, #tpu.memory_space<any>> -> memref<1x32xf32, #tpu.memory_space<any>>
    %c5_i32_22 = arith.constant 5 : i32
    %c0_i32_23 = arith.constant 0 : i32
    %40 = tpu.memref_slice %arg8[%c5_i32_22, %c0_i32_23] : memref<8x32xf32, #tpu.memory_space<vmem>> -> memref<1x32xf32, #tpu.memory_space<vmem>>
    %41 = tpu.memref_slice %arg9[%c5_i32_20] : memref<8x!tpu.dma_semaphore, #tpu.memory_space<semaphore_mem>> -> memref<1x!tpu.dma_semaphore, #tpu.memory_space<semaphore_mem>>
    %42 = tpu.memref_squeeze %41 : memref<1x!tpu.dma_semaphore, #tpu.memory_space<semaphore_mem>> -> memref<!tpu.dma_semaphore, #tpu.memory_space<semaphore_mem>>
    tpu.enqueue_dma source(%39 : memref<1x32xf32, #tpu.memory_space<any>>) target(%40 : memref<1x32xf32, #tpu.memory_space<vmem>>) target_semaphore(%42 : memref<!tpu.dma_semaphore, #tpu.memory_space<semaphore_mem>>)
    %c6_i32 = arith.constant 6 : i32
    %43 = arith.addi %0, %c6_i32 : i32
    %44 = arith.index_cast %43 : i32 to index
    %45 = memref.load %arg1[%44] : memref<16xi32, #tpu.memory_space<smem>>
    %c6_i32_24 = arith.constant 6 : i32
    %c0_i32_25 = arith.constant 0 : i32
    %46 = tpu.memref_slice %arg3[%45, %c0_i32_25] : memref<64x32xf32, #tpu.memory_space<any>> -> memref<1x32xf32, #tpu.memory_space<any>>
    %c6_i32_26 = arith.constant 6 : i32
    %c0_i32_27 = arith.constant 0 : i32
    %47 = tpu.memref_slice %arg8[%c6_i32_26, %c0_i32_27] : memref<8x32xf32, #tpu.memory_space<vmem>> -> memref<1x32xf32, #tpu.memory_space<vmem>>
    %48 = tpu.memref_slice %arg9[%c6_i32_24] : memref<8x!tpu.dma_semaphore, #tpu.memory_space<semaphore_mem>> -> memref<1x!tpu.dma_semaphore, #tpu.memory_space<semaphore_mem>>
    %49 = tpu.memref_squeeze %48 : memref<1x!tpu.dma_semaphore, #tpu.memory_space<semaphore_mem>> -> memref<!tpu.dma_semaphore, #tpu.memory_space<semaphore_mem>>
    tpu.enqueue_dma source(%46 : memref<1x32xf32, #tpu.memory_space<any>>) target(%47 : memref<1x32xf32, #tpu.memory_space<vmem>>) target_semaphore(%49 : memref<!tpu.dma_semaphore, #tpu.memory_space<semaphore_mem>>)
    %c7_i32 = arith.constant 7 : i32
    %50 = arith.addi %0, %c7_i32 : i32
    %51 = arith.index_cast %50 : i32 to index
    %52 = memref.load %arg1[%51] : memref<16xi32, #tpu.memory_space<smem>>
    %c7_i32_28 = arith.constant 7 : i32
    %c0_i32_29 = arith.constant 0 : i32
    %53 = tpu.memref_slice %arg3[%52, %c0_i32_29] : memref<64x32xf32, #tpu.memory_space<any>> -> memref<1x32xf32, #tpu.memory_space<any>>
    %c7_i32_30 = arith.constant 7 : i32
    %c0_i32_31 = arith.constant 0 : i32
    %54 = tpu.memref_slice %arg8[%c7_i32_30, %c0_i32_31] : memref<8x32xf32, #tpu.memory_space<vmem>> -> memref<1x32xf32, #tpu.memory_space<vmem>>
    %55 = tpu.memref_slice %arg9[%c7_i32_28] : memref<8x!tpu.dma_semaphore, #tpu.memory_space<semaphore_mem>> -> memref<1x!tpu.dma_semaphore, #tpu.memory_space<semaphore_mem>>
    %56 = tpu.memref_squeeze %55 : memref<1x!tpu.dma_semaphore, #tpu.memory_space<semaphore_mem>> -> memref<!tpu.dma_semaphore, #tpu.memory_space<semaphore_mem>>
    tpu.enqueue_dma source(%53 : memref<1x32xf32, #tpu.memory_space<any>>) target(%54 : memref<1x32xf32, #tpu.memory_space<vmem>>) target_semaphore(%56 : memref<!tpu.dma_semaphore, #tpu.memory_space<semaphore_mem>>)
    %c0_i32_32 = arith.constant 0 : i32
    %c8_i32_33 = arith.constant 8 : i32
    %57 = arith.addi %c0_i32_32, %c8_i32_33 : i32
    %c1_i32_34 = arith.constant 1 : i32
    scf.for %arg10 = %c0_i32_32 to %57 step %c1_i32_34  : i32 {
      %c1_i32_53 = arith.constant 1 : i32
      %146 = arith.muli %arg10, %c1_i32_53 : i32
      %c0_i32_54 = arith.constant 0 : i32
      %147 = arith.addi %c0_i32_54, %146 : i32
      %148 = arith.addi %0, %147 : i32
      %149 = arith.index_cast %148 : i32 to index
      %150 = memref.load %arg1[%149] : memref<16xi32, #tpu.memory_space<smem>>
      %c8_i32_55 = arith.constant 8 : i32
      %c0_i32_56 = arith.constant 0 : i32
      %151 = arith.cmpi eq, %c8_i32_55, %c0_i32_56 : i32
      %c1_i32_57 = arith.constant 1 : i32
      %152 = arith.select %151, %c1_i32_57, %c8_i32_55 : i32
      %153 = arith.remsi %147, %152 : i32
      %c0_i32_58 = arith.constant 0 : i32
      %154 = arith.cmpi ne, %153, %c0_i32_58 : i32
      %c0_i32_59 = arith.constant 0 : i32
      %155 = arith.cmpi slt, %153, %c0_i32_59 : i32
      %c0_i32_60 = arith.constant 0 : i32
      %156 = arith.cmpi slt, %152, %c0_i32_60 : i32
      %157 = arith.xori %155, %156 : i1
      %158 = arith.andi %157, %154 : i1
      %159 = arith.addi %153, %152 : i32
      %160 = arith.select %158, %159, %153 : i32
      %c0_i32_61 = arith.constant 0 : i32
      %161 = tpu.memref_slice %arg3[%150, %c0_i32_61] : memref<64x32xf32, #tpu.memory_space<any>> -> memref<1x32xf32, #tpu.memory_space<any>>
      %c0_i32_62 = arith.constant 0 : i32
      %162 = tpu.memref_slice %arg8[%147, %c0_i32_62] : memref<8x32xf32, #tpu.memory_space<vmem>> -> memref<1x32xf32, #tpu.memory_space<vmem>>
      %163 = tpu.memref_slice %arg9[%160] : memref<8x!tpu.dma_semaphore, #tpu.memory_space<semaphore_mem>> -> memref<1x!tpu.dma_semaphore, #tpu.memory_space<semaphore_mem>>
      %164 = tpu.memref_squeeze %163 : memref<1x!tpu.dma_semaphore, #tpu.memory_space<semaphore_mem>> -> memref<!tpu.dma_semaphore, #tpu.memory_space<semaphore_mem>>
      tpu.wait_dma2 semaphore(%164 : memref<!tpu.dma_semaphore, #tpu.memory_space<semaphore_mem>>) src(%161 : memref<1x32xf32, #tpu.memory_space<any>>) dst(%162 : memref<1x32xf32, #tpu.memory_space<vmem>>)
      %c8_i32_63 = arith.constant 8 : i32
      %165 = arith.addi %147, %c8_i32_63 : i32
      %c8_i32_64 = arith.constant 8 : i32
      %166 = arith.cmpi slt, %165, %c8_i32_64 : i32
      %167 = arith.extui %166 : i1 to i32
      %c0_i32_65 = arith.constant 0 : i32
      %168 = arith.cmpi ne, %167, %c0_i32_65 : i32
      scf.if %168 {
        %169 = arith.addi %0, %165 : i32
        %170 = arith.index_cast %169 : i32 to index
        %171 = memref.load %arg1[%170] : memref<16xi32, #tpu.memory_space<smem>>
        %c8_i32_66 = arith.constant 8 : i32
        %c0_i32_67 = arith.constant 0 : i32
        %172 = arith.cmpi eq, %c8_i32_66, %c0_i32_67 : i32
        %c1_i32_68 = arith.constant 1 : i32
        %173 = arith.select %172, %c1_i32_68, %c8_i32_66 : i32
        %174 = arith.remsi %165, %173 : i32
        %c0_i32_69 = arith.constant 0 : i32
        %175 = arith.cmpi ne, %174, %c0_i32_69 : i32
        %c0_i32_70 = arith.constant 0 : i32
        %176 = arith.cmpi slt, %174, %c0_i32_70 : i32
        %c0_i32_71 = arith.constant 0 : i32
        %177 = arith.cmpi slt, %173, %c0_i32_71 : i32
        %178 = arith.xori %176, %177 : i1
        %179 = arith.andi %178, %175 : i1
        %180 = arith.addi %174, %173 : i32
        %181 = arith.select %179, %180, %174 : i32
        %c0_i32_72 = arith.constant 0 : i32
        %182 = tpu.memref_slice %arg3[%171, %c0_i32_72] : memref<64x32xf32, #tpu.memory_space<any>> -> memref<1x32xf32, #tpu.memory_space<any>>
        %c0_i32_73 = arith.constant 0 : i32
        %183 = tpu.memref_slice %arg8[%165, %c0_i32_73] : memref<8x32xf32, #tpu.memory_space<vmem>> -> memref<1x32xf32, #tpu.memory_space<vmem>>
        %184 = tpu.memref_slice %arg9[%181] : memref<8x!tpu.dma_semaphore, #tpu.memory_space<semaphore_mem>> -> memref<1x!tpu.dma_semaphore, #tpu.memory_space<semaphore_mem>>
        %185 = tpu.memref_squeeze %184 : memref<1x!tpu.dma_semaphore, #tpu.memory_space<semaphore_mem>> -> memref<!tpu.dma_semaphore, #tpu.memory_space<semaphore_mem>>
        tpu.enqueue_dma source(%182 : memref<1x32xf32, #tpu.memory_space<any>>) target(%183 : memref<1x32xf32, #tpu.memory_space<vmem>>) target_semaphore(%185 : memref<!tpu.dma_semaphore, #tpu.memory_space<semaphore_mem>>)
      } else {
      }
    }
    %c8_i32_35 = arith.constant 8 : i32
    %c0 = arith.constant 0 : index
    %c0_36 = arith.constant 0 : index
    %58 = vector.load %arg2[%c0, %c0_36] : memref<8x8xi32, #tpu.memory_space<vmem>>, vector<8x8xi32>
    %59 = vector.extract_strided_slice %58 {offsets = [0, 0], sizes = [8, 1], strides = [1, 1]} : vector<8x8xi32> to vector<8x1xi32>
    %60 = vector.extract_strided_slice %58 {offsets = [0, 1], sizes = [8, 1], strides = [1, 1]} : vector<8x8xi32> to vector<8x1xi32>
    %61 = vector.extract_strided_slice %58 {offsets = [0, 2], sizes = [8, 1], strides = [1, 1]} : vector<8x8xi32> to vector<8x1xi32>
    %62 = vector.extract_strided_slice %58 {offsets = [0, 3], sizes = [8, 1], strides = [1, 1]} : vector<8x8xi32> to vector<8x1xi32>
    %63 = vector.extract_strided_slice %58 {offsets = [0, 4], sizes = [8, 1], strides = [1, 1]} : vector<8x8xi32> to vector<8x1xi32>
    %64 = vector.extract_strided_slice %58 {offsets = [0, 5], sizes = [8, 1], strides = [1, 1]} : vector<8x8xi32> to vector<8x1xi32>
    %65 = tpu.iota {dimensions = array<i32: 1>} : vector<8x640xi32>
    %66 = vector.broadcast %61 : vector<8x1xi32> to vector<8x640xi32>
    %67 = arith.cmpi eq, %65, %66 : vector<8x640xi32>
    %68 = arith.extui %67 : vector<8x640xi1> to vector<8x640xi32>
    %69 = arith.sitofp %68 : vector<8x640xi32> to vector<8x640xf32>
    %70 = vector.broadcast %63 : vector<8x1xi32> to vector<8x640xi32>
    %71 = arith.cmpi eq, %65, %70 : vector<8x640xi32>
    %72 = arith.extui %71 : vector<8x640xi1> to vector<8x640xi32>
    %73 = arith.sitofp %72 : vector<8x640xi32> to vector<8x640xf32>
    %74 = arith.addf %69, %73 : vector<8x640xf32>
    %c128_i32 = arith.constant 128 : i32
    %75 = vector.broadcast %c128_i32 : i32 to vector<8x1xi32>
    %76 = arith.addi %62, %75 : vector<8x1xi32>
    %77 = vector.broadcast %76 : vector<8x1xi32> to vector<8x640xi32>
    %78 = arith.cmpi eq, %65, %77 : vector<8x640xi32>
    %79 = arith.extui %78 : vector<8x640xi1> to vector<8x640xi32>
    %80 = arith.sitofp %79 : vector<8x640xi32> to vector<8x640xf32>
    %81 = arith.addf %74, %80 : vector<8x640xf32>
    %c128_i32_37 = arith.constant 128 : i32
    %82 = vector.broadcast %c128_i32_37 : i32 to vector<8x1xi32>
    %83 = arith.addi %64, %82 : vector<8x1xi32>
    %84 = vector.broadcast %83 : vector<8x1xi32> to vector<8x640xi32>
    %85 = arith.cmpi eq, %65, %84 : vector<8x640xi32>
    %86 = arith.extui %85 : vector<8x640xi1> to vector<8x640xi32>
    %87 = arith.sitofp %86 : vector<8x640xi32> to vector<8x640xf32>
    %88 = arith.addf %81, %87 : vector<8x640xf32>
    %89 = arith.subi %64, %62 : vector<8x1xi32>
    %c256_i32 = arith.constant 256 : i32
    %90 = vector.broadcast %c256_i32 : i32 to vector<8x1xi32>
    %91 = arith.addi %89, %90 : vector<8x1xi32>
    %92 = vector.broadcast %91 : vector<8x1xi32> to vector<8x640xi32>
    %93 = arith.cmpi eq, %65, %92 : vector<8x640xi32>
    %94 = arith.extui %93 : vector<8x640xi1> to vector<8x640xi32>
    %95 = arith.sitofp %94 : vector<8x640xi32> to vector<8x640xf32>
    %96 = arith.addf %88, %95 : vector<8x640xf32>
    %97 = arith.subi %63, %61 : vector<8x1xi32>
    %c384_i32 = arith.constant 384 : i32
    %98 = vector.broadcast %c384_i32 : i32 to vector<8x1xi32>
    %99 = arith.addi %97, %98 : vector<8x1xi32>
    %100 = vector.broadcast %99 : vector<8x1xi32> to vector<8x640xi32>
    %101 = arith.cmpi eq, %65, %100 : vector<8x640xi32>
    %102 = arith.extui %101 : vector<8x640xi1> to vector<8x640xi32>
    %103 = arith.sitofp %102 : vector<8x640xi32> to vector<8x640xf32>
    %104 = arith.addf %96, %103 : vector<8x640xf32>
    %c512_i32 = arith.constant 512 : i32
    %105 = vector.broadcast %c512_i32 : i32 to vector<8x1xi32>
    %106 = arith.addi %59, %105 : vector<8x1xi32>
    %107 = vector.broadcast %106 : vector<8x1xi32> to vector<8x640xi32>
    %108 = arith.cmpi eq, %65, %107 : vector<8x640xi32>
    %109 = arith.extui %108 : vector<8x640xi1> to vector<8x640xi32>
    %110 = arith.sitofp %109 : vector<8x640xi32> to vector<8x640xf32>
    %111 = arith.addf %104, %110 : vector<8x640xf32>
    %c528_i32 = arith.constant 528 : i32
    %112 = vector.broadcast %c528_i32 : i32 to vector<8x1xi32>
    %113 = arith.addi %60, %112 : vector<8x1xi32>
    %114 = vector.broadcast %113 : vector<8x1xi32> to vector<8x640xi32>
    %115 = arith.cmpi eq, %65, %114 : vector<8x640xi32>
    %116 = arith.extui %115 : vector<8x640xi1> to vector<8x640xi32>
    %117 = arith.sitofp %116 : vector<8x640xi32> to vector<8x640xf32>
    %118 = arith.addf %111, %117 : vector<8x640xf32>
    %c0_38 = arith.constant 0 : index
    %c0_39 = arith.constant 0 : index
    %119 = vector.load %arg4[%c0_38, %c0_39] : memref<640x32xf32, #tpu.memory_space<vmem>>, vector<640x32xf32>
    %cst = arith.constant dense<0.000000e+00> : vector<8x32xf32>
    %120 = tpu.matmul %118, %119, %cst {dimension_numbers = #tpu.dot_dimension_numbers<[1], [0], [0], [1], [0, 0, 1, 1], [], []>} : vector<8x640xf32>, vector<640x32xf32>, vector<8x32xf32> -> vector<8x32xf32>
    %c0_40 = arith.constant 0 : index
    %c0_41 = arith.constant 0 : index
    %121 = vector.load %arg8[%c0_40, %c0_41] : memref<8x32xf32, #tpu.memory_space<vmem>>, vector<8x32xf32>
    %122 = arith.addf %120, %121 : vector<8x32xf32>
    %cst_42 = arith.constant dense<0.000000e+00> : vector<8xf32>
    %123 = vector.multi_reduction <add>, %122, %cst_42 [1] : vector<8x32xf32> to vector<8xf32>
    %124 = vector.shape_cast %123 : vector<8xf32> to vector<8x1xf32>
    %cst_43 = arith.constant 3.125000e-02 : f32
    %125 = vector.broadcast %cst_43 : f32 to vector<8x1xf32>
    %126 = arith.mulf %124, %125 : vector<8x1xf32>
    %127 = vector.broadcast %126 : vector<8x1xf32> to vector<8x32xf32>
    %128 = arith.subf %122, %127 : vector<8x32xf32>
    %129 = arith.mulf %128, %128 : vector<8x32xf32>
    %cst_44 = arith.constant dense<0.000000e+00> : vector<8xf32>
    %130 = vector.multi_reduction <add>, %129, %cst_44 [1] : vector<8x32xf32> to vector<8xf32>
    %131 = vector.shape_cast %130 : vector<8xf32> to vector<8x1xf32>
    %cst_45 = arith.constant 3.125000e-02 : f32
    %132 = vector.broadcast %cst_45 : f32 to vector<8x1xf32>
    %133 = arith.mulf %131, %132 : vector<8x1xf32>
    %cst_46 = arith.constant 9.99999996E-13 : f32
    %134 = vector.broadcast %cst_46 : f32 to vector<8x1xf32>
    %135 = arith.addf %133, %134 : vector<8x1xf32>
    %136 = math.rsqrt %135 : vector<8x1xf32>
    %137 = vector.broadcast %136 : vector<8x1xf32> to vector<8x32xf32>
    %138 = arith.mulf %128, %137 : vector<8x32xf32>
    %c0_47 = arith.constant 0 : index
    %c0_48 = arith.constant 0 : index
    %139 = vector.load %arg5[%c0_47, %c0_48] : memref<1x32xf32, #tpu.memory_space<vmem>>, vector<1x32xf32>
    %140 = vector.broadcast %139 : vector<1x32xf32> to vector<8x32xf32>
    %141 = arith.mulf %138, %140 : vector<8x32xf32>
    %c0_49 = arith.constant 0 : index
    %c0_50 = arith.constant 0 : index
    %142 = vector.load %arg6[%c0_49, %c0_50] : memref<1x32xf32, #tpu.memory_space<vmem>>, vector<1x32xf32>
    %143 = vector.broadcast %142 : vector<1x32xf32> to vector<8x32xf32>
    %144 = arith.addf %141, %143 : vector<8x32xf32>
    %c0_51 = arith.constant 0 : index
    %c0_52 = arith.constant 0 : index
    %145 = vector.load %arg7[%c0_51, %c0_52] : memref<8x32xf32, #tpu.memory_space<vmem>>, vector<8x32xf32>
    tpu.vector_store %arg7[%c0_51, %c0_52], %144 {strides = array<i32>} : memref<8x32xf32, #tpu.memory_space<vmem>>, vector<8x32xf32>,
    return
  }
  func.func @transform_0(%arg0: i32, %arg1: memref<16xi32, #tpu.memory_space<smem>>) -> (i32, i32) {
    %c0_i32 = arith.constant 0 : i32
    %c0_i32_0 = arith.constant 0 : i32
    return %arg0, %c0_i32 : i32, i32
  }
  func.func @transform_2(%arg0: i32, %arg1: memref<16xi32, #tpu.memory_space<smem>>) -> (i32, i32) {
    %c0_i32 = arith.constant 0 : i32
    %c0_i32_0 = arith.constant 0 : i32
    %c0_i32_1 = arith.constant 0 : i32
    return %c0_i32, %c0_i32_0 : i32, i32
  }
  func.func @transform_3(%arg0: i32, %arg1: memref<16xi32, #tpu.memory_space<smem>>) -> (i32, i32) {
    %c0_i32 = arith.constant 0 : i32
    %c0_i32_0 = arith.constant 0 : i32
    %c0_i32_1 = arith.constant 0 : i32
    return %c0_i32, %c0_i32_0 : i32, i32
  }
  func.func @transform_4(%arg0: i32, %arg1: memref<16xi32, #tpu.memory_space<smem>>) -> (i32, i32) {
    %c0_i32 = arith.constant 0 : i32
    %c0_i32_0 = arith.constant 0 : i32
    %c0_i32_1 = arith.constant 0 : i32
    return %c0_i32, %c0_i32_0 : i32, i32
  }
  func.func @transform_5(%arg0: i32, %arg1: memref<16xi32, #tpu.memory_space<smem>>) -> (i32, i32) {
    %c0_i32 = arith.constant 0 : i32
    %c0_i32_0 = arith.constant 0 : i32
    return %arg0, %c0_i32 : i32, i32
  }
}

</mosaic_0001>

<llo_original>
// kernel: tpu_custom_call.1
$region0: #{tpu_custom_call.1}
  #allocation0 [shape = 'u32[]', space=smem, size = 0x4, offset = 0x4, fixed_abs, tag = 'smem constant byte address 0x4 - core index']
  #allocation1 [shape = 'u32[144,128]{1,0:T(1,128)}', space=vmem, size = 0x12000, scoped, tag = 'internal scratch']
  #allocation2 [shape = 'f32[8,32]{1,0:T(8,128)}', space=vmem, size = 0x1000, scoped, tag = 'scratch operand']
  #allocation3 [shape = 's32[8]{0}', space=sflag, size = 0x20, scoped, tag = 'scratch operand']
  #allocation4 [shape = 's32[1]{0}', space=sflag, size = 0x4, scoped, tag = 'scoped memory for tpu_custom_call.1']
  #allocation5 [shape = 'u8[512]{0}', space=smem, size = 0x200, scoped, tag = 'prefetched SMEM operand 0']
  #allocation15 [shape = 's32[]', space=sflag, size = 0x4, offset = 0, fixed_abs, tag = 'sflag constant byte address 0x0 - dummy sync flag']
  #allocation16 [shape = 's32[]', space=sflag, size = 0x4, offset = 0, fixed_abs, tag = 'sflag constant byte address 0x0 - dummy sync flag']
  #allocation17 [shape = 'u32[]', space=smem, size = 0x4, offset = 0x44, fixed_abs, tag = 'smem constant byte address 0x44 - assertion arg 0']
  #allocation18 [shape = 'u32[]', space=smem, size = 0x4, offset = 0x48, fixed_abs, tag = 'smem constant byte address 0x48 - assertion arg 1']
  #allocation19 [shape = 's32[]', space=sflag, size = 0x4, offset = 0, fixed_abs, tag = 'sflag constant byte address 0x0 - dummy sync flag']
  #allocation20 [shape = 's32[]', space=sflag, size = 0x4, offset = 0, fixed_abs, tag = 'sflag constant byte address 0x0 - dummy sync flag']
  #allocation21 [shape = 's32[]', space=sflag, size = 0x4, offset = 0, fixed_abs, tag = 'sflag constant byte address 0x0 - dummy sync flag']
  #allocation22 [shape = 's32[]', space=sflag, size = 0x4, offset = 0, fixed_abs, tag = 'sflag constant byte address 0x0 - dummy sync flag']
  #allocation23 [shape = 's32[]', space=sflag, size = 0x4, offset = 0, fixed_abs, tag = 'sflag constant byte address 0x0 - dummy sync flag']
  #allocation24 [shape = 's32[]', space=sflag, size = 0x4, offset = 0, fixed_abs, tag = 'sflag constant byte address 0x0 - dummy sync flag']
  #allocation25 [shape = 's32[]', space=sflag, size = 0x4, offset = 0, fixed_abs, tag = 'sflag constant byte address 0x0 - dummy sync flag']
  #allocation26 [shape = 's32[]', space=sflag, size = 0x4, offset = 0, fixed_abs, tag = 'sflag constant byte address 0x0 - dummy sync flag']
  #allocation27 [shape = 's32[]', space=sflag, size = 0x4, offset = 0, fixed_abs, tag = 'sflag constant byte address 0x0 - dummy sync flag']
  #allocation28 [shape = 's32[]', space=sflag, size = 0x4, offset = 0, fixed_abs, tag = 'sflag constant byte address 0x0 - dummy sync flag']
  #allocation29 [shape = 's32[]', space=sflag, size = 0x4, offset = 0, fixed_abs, tag = 'sflag constant byte address 0x0 - dummy sync flag']
  #allocation30 [shape = 's32[]', space=sflag, size = 0x4, offset = 0, fixed_abs, tag = 'sflag constant byte address 0x0 - dummy sync flag']
  #allocation31 [shape = 's32[]', space=sflag, size = 0x4, offset = 0, fixed_abs, tag = 'sflag constant byte address 0x0 - dummy sync flag']
  #allocation32 [shape = 's32[]', space=sflag, size = 0x4, offset = 0, fixed_abs, tag = 'sflag constant byte address 0x0 - dummy sync flag']
  #allocation33 [shape = 's32[]', space=sflag, size = 0x4, offset = 0, fixed_abs, tag = 'sflag constant byte address 0x0 - dummy sync flag']
  #allocation34 [shape = 's32[]', space=sflag, size = 0x4, offset = 0, fixed_abs, tag = 'sflag constant byte address 0x0 - dummy sync flag']
  %s0 = inlined_call_operand.hbm [shape: s32[16], index: 0, kind: input, shape index: {}]
  %s1 = inlined_call_operand.hbm [shape: s32[16,8], index: 1, kind: input, shape index: {}]
  %s2 = inlined_call_operand.hbm [shape: f32[64,32], index: 2, kind: input, shape index: {}]
  %s3 = inlined_call_operand.hbm [shape: f32[640,32], index: 3, kind: input, shape index: {}]
  %s4 = inlined_call_operand.hbm [shape: f32[1,32], index: 4, kind: input, shape index: {}]
  %s5 = inlined_call_operand.hbm [shape: f32[1,32], index: 5, kind: input, shape index: {}]
  %s6 = inlined_call_operand.hbm [shape: f32[16,32], index: 6, kind: output, shape index: {}]
  %s7 = sld [smem:[#allocation0]]
  $region112: #{tpu_custom_call.1} parent=0
    _
  %s9 = ssub.s32 1, %s7
  %s10 = scalar_select 0, %s9, %s7
  %12 = dma.hbm_to_smem %s0, 16, [#allocation5], [#allocation4]
  %13 = dma.done [#allocation4], 16
  %14 = sfence
  $region1: #{tpu_custom_call.1} parent=0
    #allocation6 [shape = 'u8[8192]{0}', space=vmem, size = 0x2000, scoped, tag = 'input window, operand 1']
    #allocation7 [shape = 's32[2]{0}', space=sflag, size = 0x8, scoped, tag = 'scoped memory for tpu_custom_call.1']
    #allocation8 [shape = 's32[2]{0}', space=sflag, size = 0x8, scoped, tag = 'scoped memory for tpu_custom_call.1']
    #allocation9 [shape = 'u8[327680]{0}', space=vmem, size = 0x50000, scoped, tag = 'input window, operand 3, single buffered']
    #allocation10 [shape = 's32[1]{0}', space=sflag, size = 0x4, scoped, tag = 'scoped memory for tpu_custom_call.1']
    #allocation11 [shape = 'u8[512]{0}', space=vmem, size = 0x400, scoped, tag = 'input window, operand 4, single buffered']
    #allocation12 [shape = 'u8[512]{0}', space=vmem, size = 0x400, scoped, tag = 'input window, operand 5, single buffered']
    #allocation13 [shape = 's32[1]{0}', space=sflag, size = 0x4, scoped, tag = 'scoped memory for tpu_custom_call.1']
    #allocation14 [shape = 'u8[8192]{0}', space=vmem, size = 0x2000, scoped, tag = 'output window, operand 0']
    %15 = vsyncpa [#allocation7], 0
    %s16 = scalar_lea.sflag [#allocation7], 1
    %17 = vsyncpa %s16, 0
    %18 = vsyncpa [#allocation10], 0
    %19 = vsyncpa [#allocation13], 0
    %20 = vsyncpa [#allocation8], 0
    %s21 = scalar_lea.sflag [#allocation8], 1
    %22 = vsyncpa %s21, 0
    loop: start=0, step=1, limit=4
    $region2: #{tpu_custom_call.1} parent=1 // loop_pre_header
      _
    $region3: #{tpu_custom_call.1} parent=1 // loop_header
      %s24 = sphi 0, %s28
      %p25 = scmp.ge.s32.totalorder %s24, 4
      %s34 = sphi 0, %s36
      %s37 = sphi 0, %s34
      %s38 = sphi 0, %s37
      %s54 = sphi 0, %s38
      %s58 = sphi 0, %s58
      %s60 = sphi 0, %s58
      %s61 = sphi 0, %s60
      %s75 = sphi 0, %s61
      %s79 = sphi 0, %s79
      %s81 = sphi 0, %s79
      %s82 = sphi 0, %s81
      %s96 = sphi 0, %s82
      %s100 = sphi 0, %s100
      %s102 = sphi 0, %s100
      %s103 = sphi 0, %s102
      %s117 = sphi 0, %s103
      %s123 = sphi 0, %s125
      %s126 = sphi 0, %s123
      %s127 = sphi 0, %s126
      %s143 = sphi 0, %s127
    $region4: #{tpu_custom_call.1} parent=1 // loop_header_branch
      %27 = sbr.rel (%p25) target = $region8
    $region5: #{tpu_custom_call.1} parent=1 // loop_body
      %s29 = ssub.s32 %s24, 1
      %s30 = ssub.s32 %s24, 2
      %s31 = sadd.s32 %s24, 1
      %s32 = ssub.s32 %s24, %s31
      %p33 = scmp.eq.s32.totalorder %s32, 0
      %s35 = sadd.s32 %s34, 1
      %s36 = scalar_select %p33, %s34, %s35
      %p39 = pneg %p33
      %p40 = scmp.eq.s32.totalorder %s24, 1
      %p41 = por %p39, %p40
      %p42 = scmp.ne.s32.totalorder %s34, %s37
      %p43 = scmp.eq.s32.totalorder %s24, 0
      %p44 = por %p42, %p43
      %p45 = scmp.ne.s32.totalorder %s34, %s37
      %p46 = scmp.eq.s32.totalorder %s29, 1
      %p47 = por %p45, %p46
      %p48 = scmp.ne.s32.totalorder %s37, %s38
      %p49 = scmp.eq.s32.totalorder %s29, 0
      %p50 = por %p48, %p49
      %p51 = scmp.ne.s32.totalorder %s37, %s38
      %p52 = scmp.eq.s32.totalorder %s30, 1
      %p53 = por %p51, %p52
      %p55 = scmp.ne.s32.totalorder %s38, %s54
      %p56 = scmp.eq.s32.totalorder %s30, 0
      %p57 = por %p55, %p56
      %s59 = sadd.s32 %s58, 1
      %p62 = scmp.eq.s32.totalorder %s24, 1
      %p63 = scmp.ne.s32.totalorder %s58, %s60
      %p64 = scmp.eq.s32.totalorder %s24, 0
      %p65 = por %p63, %p64
      %p66 = scmp.ne.s32.totalorder %s58, %s60
      %p67 = scmp.eq.s32.totalorder %s29, 1
      %p68 = por %p66, %p67
      %p69 = scmp.ne.s32.totalorder %s60, %s61
      %p70 = scmp.eq.s32.totalorder %s29, 0
      %p71 = por %p69, %p70
      %p72 = scmp.ne.s32.totalorder %s60, %s61
      %p73 = scmp.eq.s32.totalorder %s30, 1
      %p74 = por %p72, %p73
      %p76 = scmp.ne.s32.totalorder %s61, %s75
      %p77 = scmp.eq.s32.totalorder %s30, 0
      %p78 = por %p76, %p77
      %s80 = sadd.s32 %s79, 1
      %p83 = scmp.eq.s32.totalorder %s24, 1
      %p84 = scmp.ne.s32.totalorder %s79, %s81
      %p85 = scmp.eq.s32.totalorder %s24, 0
      %p86 = por %p84, %p85
      %p87 = scmp.ne.s32.totalorder %s79, %s81
      %p88 = scmp.eq.s32.totalorder %s29, 1
      %p89 = por %p87, %p88
      %p90 = scmp.ne.s32.totalorder %s81, %s82
      %p91 = scmp.eq.s32.totalorder %s29, 0
      %p92 = por %p90, %p91
      %p93 = scmp.ne.s32.totalorder %s81, %s82
      %p94 = scmp.eq.s32.totalorder %s30, 1
      %p95 = por %p93, %p94
      %p97 = scmp.ne.s32.totalorder %s82, %s96
      %p98 = scmp.eq.s32.totalorder %s30, 0
      %p99 = por %p97, %p98
      %s101 = sadd.s32 %s100, 1
      %p104 = scmp.eq.s32.totalorder %s24, 1
      %p105 = scmp.ne.s32.totalorder %s100, %s102
      %p106 = scmp.eq.s32.totalorder %s24, 0
      %p107 = por %p105, %p106
      %p108 = scmp.ne.s32.totalorder %s100, %s102
      %p109 = scmp.eq.s32.totalorder %s29, 1
      %p110 = por %p108, %p109
      %p111 = scmp.ne.s32.totalorder %s102, %s103
      %p112 = scmp.eq.s32.totalorder %s29, 0
      %p113 = por %p111, %p112
      %p114 = scmp.ne.s32.totalorder %s102, %s103
      %p115 = scmp.eq.s32.totalorder %s30, 1
      %p116 = por %p114, %p115
      %p118 = scmp.ne.s32.totalorder %s103, %s117
      %p119 = scmp.eq.s32.totalorder %s30, 0
      %p120 = por %p118, %p119
      %s121 = ssub.s32 %s24, %s31
      %p122 = scmp.eq.s32.totalorder %s121, 0
      %s124 = sadd.s32 %s123, 1
      %s125 = scalar_select %p122, %s123, %s124
      %p128 = pneg %p122
      %p129 = scmp.eq.s32.totalorder %s24, 1
      %p130 = por %p128, %p129
      %p131 = scmp.ne.s32.totalorder %s123, %s126
      %p132 = scmp.eq.s32.totalorder %s24, 0
      %p133 = por %p131, %p132
      %p134 = scmp.ne.s32.totalorder %s123, %s126
      %p135 = scmp.eq.s32.totalorder %s29, 1
      %p136 = por %p134, %p135
      %p137 = scmp.ne.s32.totalorder %s126, %s127
      %p138 = scmp.eq.s32.totalorder %s29, 0
      %p139 = por %p137, %p138
      %p140 = scmp.ne.s32.totalorder %s126, %s127
      %p141 = scmp.eq.s32.totalorder %s30, 1
      %p142 = por %p140, %p141
      %p144 = scmp.ne.s32.totalorder %s127, %s143
      %p145 = scmp.eq.s32.totalorder %s30, 0
      %p146 = por %p144, %p145
      %p147 = scmp.le.s32.totalorder 1, %s24
      %p148 = scmp.lt.s32.totalorder %s24, 3
      %p149 = pnand %p147, %p148
      %p150 = pneg %p149
      // Predicated region
      $region9: #{tpu_custom_call.1} parent=5 // pred_check
        _
      $region10: #{tpu_custom_call.1} parent=5 // pred_check_branch
        %152 = sbr.rel (%p149) target = $region12
      $region11: #{tpu_custom_call.1} parent=5 // pred_region
        %s153 = ssub.s32 %s24, 1
        // Predicated region
        $region13: #{tpu_custom_call.1} parent=11 // pred_check
          %p154 = pneg %p71
        $region14: #{tpu_custom_call.1} parent=11 // pred_check_branch
          %156 = sbr.rel (%p154) target = $region16
        $region15: #{tpu_custom_call.1} parent=11 // pred_region
          %s158 = ssub.s32 10240, 10240
          %159 = vsyncadd [#allocation10], %s158
          %s160 = sshll.u32 [#allocation9], 4
          %s161 = int_to_ptr.vmem [resolvable:$true] %s160
          %166 = dma.hbm_to_vmem [thread:$0]  %s3, 10240, %s161, [#allocation10], 128, 128, 8
        $region16: #{tpu_custom_call.1} parent=11 // pred_fallthru
          _
        // Predicated region
        $region17: #{tpu_custom_call.1} parent=11 // pred_check
          %p167 = pneg %p92
        $region18: #{tpu_custom_call.1} parent=11 // pred_check_branch
          %169 = sbr.rel (%p167) target = $region20
        $region19: #{tpu_custom_call.1} parent=11 // pred_region
          %s171 = ssub.s32 16, 16
          %172 = vsyncadd [#allocation10], %s171
          %s174 = sshll.u32 [#allocation11], 4
          %s175 = int_to_ptr.vmem [resolvable:$true] %s174
          %177 = dma.hbm_to_vmem [thread:$0]  %s4, 16, %s175, [#allocation10]
        $region20: #{tpu_custom_call.1} parent=11 // pred_fallthru
          _
        // Predicated region
        $region21: #{tpu_custom_call.1} parent=11 // pred_check
          %p178 = pneg %p113
        $region22: #{tpu_custom_call.1} parent=11 // pred_check_branch
          %180 = sbr.rel (%p178) target = $region24
        $region23: #{tpu_custom_call.1} parent=11 // pred_region
          %s182 = ssub.s32 16, 16
          %183 = vsyncadd [#allocation13], %s182
          %s185 = sshll.u32 [#allocation12], 4
          %s186 = int_to_ptr.vmem [resolvable:$true] %s185
          %188 = dma.hbm_to_vmem [thread:$0]  %s5, 16, %s186, [#allocation13]
        $region24: #{tpu_custom_call.1} parent=11 // pred_fallthru
          _
      $region12: #{tpu_custom_call.1} parent=5 // pred_fallthru
        _
      %p189 = scmp.lt.s32.totalorder %s24, 2
      // Predicated region
      $region25: #{tpu_custom_call.1} parent=5 // pred_check
        %p190 = pneg %p189
      $region26: #{tpu_custom_call.1} parent=5 // pred_check_branch
        %192 = sbr.rel (%p190) target = $region28
      $region27: #{tpu_custom_call.1} parent=5 // pred_region
        // Predicated region
        $region29: #{tpu_custom_call.1} parent=27 // pred_check
          %p193 = pneg %p44
        $region30: #{tpu_custom_call.1} parent=27 // pred_check_branch
          %195 = sbr.rel (%p193) target = $region32
        $region31: #{tpu_custom_call.1} parent=27 // pred_region
          %s196 = sand.u32 %s34, 1
          %s197 = scalar_lea.sflag [#allocation7], %s196
          %s198 = sand.u32 %s34, 1
          %s199 = smul.addr %s198, 8
          %s200 = scalar_lea.vmem [#allocation6], %s199
          %s202 = ssub.s32 128, 128
          %203 = vsyncadd %s197, %s202
          %s204 = smul.addr %s24, 128
          %s205 = scalar_lea.hbm %s1, %s204
          %s207 = sshll.u32 %s200, 4
          %s208 = int_to_ptr.vmem [resolvable:$true] %s207
          %210 = dma.hbm_to_vmem [thread:$0]  %s205, 128, %s208, %s197
        $region32: #{tpu_custom_call.1} parent=27 // pred_fallthru
          _
      $region28: #{tpu_custom_call.1} parent=5 // pred_fallthru
        _
      %p211 = scmp.le.s32.totalorder 1, %s24
      %p212 = scmp.lt.s32.totalorder %s24, 3
      %p213 = pnand %p211, %p212
      %p214 = pneg %p213
      // Predicated region
      $region33: #{tpu_custom_call.1} parent=5 // pred_check
        _
      $region34: #{tpu_custom_call.1} parent=5 // pred_check_branch
        %216 = sbr.rel (%p213) target = $region36
      $region35: #{tpu_custom_call.1} parent=5 // pred_region
        %s217 = ssub.s32 %s24, 1
        %s218 = sand.u32 %s37, 1
        %s219 = scalar_lea.sflag [#allocation7], %s218
        %s220 = sand.u32 %s37, 1
        %s221 = smul.addr %s220, 8
        %s222 = scalar_lea.vmem [#allocation6], %s221
        // Predicated region
        $region37: #{tpu_custom_call.1} parent=35 // pred_check
          %p223 = pneg %p50
        $region38: #{tpu_custom_call.1} parent=35 // pred_check_branch
          %225 = sbr.rel (%p223) target = $region40
        $region39: #{tpu_custom_call.1} parent=35 // pred_region
          %226 = dma.done %s219, 128
        $region40: #{tpu_custom_call.1} parent=35 // pred_fallthru
          _
        // Predicated region
        $region41: #{tpu_custom_call.1} parent=35 // pred_check
          %p227 = pneg %p71
        $region42: #{tpu_custom_call.1} parent=35 // pred_check_branch
          %229 = sbr.rel (%p227) target = $region44
        $region43: #{tpu_custom_call.1} parent=35 // pred_region
          %230 = dma.done [#allocation10], 10240
        $region44: #{tpu_custom_call.1} parent=35 // pred_fallthru
          _
        // Predicated region
        $region45: #{tpu_custom_call.1} parent=35 // pred_check
          %p231 = pneg %p92
        $region46: #{tpu_custom_call.1} parent=35 // pred_check_branch
          %233 = sbr.rel (%p231) target = $region48
        $region47: #{tpu_custom_call.1} parent=35 // pred_region
          %234 = dma.done [#allocation10], 16
        $region48: #{tpu_custom_call.1} parent=35 // pred_fallthru
          _
        // Predicated region
        $region49: #{tpu_custom_call.1} parent=35 // pred_check
          %p235 = pneg %p113
        $region50: #{tpu_custom_call.1} parent=35 // pred_check_branch
          %237 = sbr.rel (%p235) target = $region52
        $region51: #{tpu_custom_call.1} parent=35 // pred_region
          %238 = dma.done [#allocation13], 16
        $region52: #{tpu_custom_call.1} parent=35 // pred_fallthru
          _
        %s239 = sand.u32 %s37, 1
        %s240 = scalar_lea.sflag [#allocation7], %s239
        %s241 = sand.u32 %s37, 1
        %s242 = smul.addr %s241, 8
        %s243 = scalar_lea.vmem [#allocation6], %s242
        %p244 = pneg %p50
        %p245 = pneg %p47
        %p246 = pneg %p71
        %p247 = pneg %p68
        %p248 = pneg %p92
        %p249 = pneg %p89
        %p250 = pneg %p113
        %p251 = pneg %p110
        %p252 = pneg %p139
        %p253 = pneg %p136
        %s254 = sand.u32 %s126, 1
        %s255 = scalar_lea.sflag [#allocation8], %s254
        %s256 = sand.u32 %s126, 1
        %s257 = smul.addr %s256, 8
        %s258 = scalar_lea.vmem [#allocation14], %s257
        %s259 = smul.u32 %s29, 8
        %s260 = sld [smem:[#allocation5 + %s259]]
        %s261 = smul.addr %s260, 16
        %s262 = scalar_lea.hbm %s2, %s261
        // Predicated region
        $region53: #{tpu_custom_call.1} parent=35 // pred_check
          _
        $region54: #{tpu_custom_call.1} parent=35 // pred_check_branch
          %264 = sbr.rel target = $region56
        $region55: #{tpu_custom_call.1} parent=35 // pred_region
          %265 = sst [smem:[#allocation17]] [#allocation16]
          %266 = sst [smem:[#allocation18]] [#allocation15]
        $region56: #{tpu_custom_call.1} parent=35 // pred_fallthru
          _
        %268 = shalt.err (0)
        %s270 = sshll.u32 [#allocation2], 4
        %s271 = int_to_ptr.vmem [resolvable:$true] %s270
        %273 = dma.hbm_to_vmem [thread:$0]  %s262, 16, %s271, [#allocation3]
        %s274 = sadd.s32 %s259, 1
        %s275 = sld [smem:[#allocation5 + %s274]]
        %s276 = smul.addr %s275, 16
        %s277 = scalar_lea.hbm %s2, %s276
        %s278 = scalar_lea.vmem [#allocation2], 1
        %s279 = scalar_lea.sflag [#allocation3], 1
        // Predicated region
        $region57: #{tpu_custom_call.1} parent=35 // pred_check
          _
        $region58: #{tpu_custom_call.1} parent=35 // pred_check_branch
          %281 = sbr.rel target = $region60
        $region59: #{tpu_custom_call.1} parent=35 // pred_region
          %282 = sst [smem:[#allocation17]] [#allocation20]
          %283 = sst [smem:[#allocation18]] [#allocation19]
        $region60: #{tpu_custom_call.1} parent=35 // pred_fallthru
          _
        %285 = shalt.err (0)
        %s287 = sshll.u32 %s278, 4
        %s288 = int_to_ptr.vmem [resolvable:$true] %s287
        %290 = dma.hbm_to_vmem [thread:$0]  %s277, 16, %s288, %s279
        %s291 = sadd.s32 %s259, 2
        %s292 = sld [smem:[#allocation5 + %s291]]
        %s293 = smul.addr %s292, 16
        %s294 = scalar_lea.hbm %s2, %s293
        %s295 = scalar_lea.vmem [#allocation2], 2
        %s296 = scalar_lea.sflag [#allocation3], 2
        // Predicated region
        $region61: #{tpu_custom_call.1} parent=35 // pred_check
          _
        $region62: #{tpu_custom_call.1} parent=35 // pred_check_branch
          %298 = sbr.rel target = $region64
        $region63: #{tpu_custom_call.1} parent=35 // pred_region
          %299 = sst [smem:[#allocation17]] [#allocation22]
          %300 = sst [smem:[#allocation18]] [#allocation21]
        $region64: #{tpu_custom_call.1} parent=35 // pred_fallthru
          _
        %302 = shalt.err (0)
        %s304 = sshll.u32 %s295, 4
        %s305 = int_to_ptr.vmem [resolvable:$true] %s304
        %307 = dma.hbm_to_vmem [thread:$0]  %s294, 16, %s305, %s296
        %s308 = sadd.s32 %s259, 3
        %s309 = sld [smem:[#allocation5 + %s308]]
        %s310 = smul.addr %s309, 16
        %s311 = scalar_lea.hbm %s2, %s310
        %s312 = scalar_lea.vmem [#allocation2], 3
        %s313 = scalar_lea.sflag [#allocation3], 3
        // Predicated region
        $region65: #{tpu_custom_call.1} parent=35 // pred_check
          _
        $region66: #{tpu_custom_call.1} parent=35 // pred_check_branch
          %315 = sbr.rel target = $region68
        $region67: #{tpu_custom_call.1} parent=35 // pred_region
          %316 = sst [smem:[#allocation17]] [#allocation24]
          %317 = sst [smem:[#allocation18]] [#allocation23]
        $region68: #{tpu_custom_call.1} parent=35 // pred_fallthru
          _
        %319 = shalt.err (0)
        %s321 = sshll.u32 %s312, 4
        %s322 = int_to_ptr.vmem [resolvable:$true] %s321
        %324 = dma.hbm_to_vmem [thread:$0]  %s311, 16, %s322, %s313
        %s325 = sadd.s32 %s259, 4
        %s326 = sld [smem:[#allocation5 + %s325]]
        %s327 = smul.addr %s326, 16
        %s328 = scalar_lea.hbm %s2, %s327
        %s329 = scalar_lea.vmem [#allocation2], 4
        %s330 = scalar_lea.sflag [#allocation3], 4
        // Predicated region
        $region69: #{tpu_custom_call.1} parent=35 // pred_check
          _
        $region70: #{tpu_custom_call.1} parent=35 // pred_check_branch
          %332 = sbr.rel target = $region72
        $region71: #{tpu_custom_call.1} parent=35 // pred_region
          %333 = sst [smem:[#allocation17]] [#allocation26]
          %334 = sst [smem:[#allocation18]] [#allocation25]
        $region72: #{tpu_custom_call.1} parent=35 // pred_fallthru
          _
        %336 = shalt.err (0)
        %s338 = sshll.u32 %s329, 4
        %s339 = int_to_ptr.vmem [resolvable:$true] %s338
        %341 = dma.hbm_to_vmem [thread:$0]  %s328, 16, %s339, %s330
        %s342 = sadd.s32 %s259, 5
        %s343 = sld [smem:[#allocation5 + %s342]]
        %s344 = smul.addr %s343, 16
        %s345 = scalar_lea.hbm %s2, %s344
        %s346 = scalar_lea.vmem [#allocation2], 5
        %s347 = scalar_lea.sflag [#allocation3], 5
        // Predicated region
        $region73: #{tpu_custom_call.1} parent=35 // pred_check
          _
        $region74: #{tpu_custom_call.1} parent=35 // pred_check_branch
          %349 = sbr.rel target = $region76
        $region75: #{tpu_custom_call.1} parent=35 // pred_region
          %350 = sst [smem:[#allocation17]] [#allocation28]
          %351 = sst [smem:[#allocation18]] [#allocation27]
        $region76: #{tpu_custom_call.1} parent=35 // pred_fallthru
          _
        %353 = shalt.err (0)
        %s355 = sshll.u32 %s346, 4
        %s356 = int_to_ptr.vmem [resolvable:$true] %s355
        %358 = dma.hbm_to_vmem [thread:$0]  %s345, 16, %s356, %s347
        %s359 = sadd.s32 %s259, 6
        %s360 = sld [smem:[#allocation5 + %s359]]
        %s361 = smul.addr %s360, 16
        %s362 = scalar_lea.hbm %s2, %s361
        %s363 = scalar_lea.vmem [#allocation2], 6
        %s364 = scalar_lea.sflag [#allocation3], 6
        // Predicated region
        $region77: #{tpu_custom_call.1} parent=35 // pred_check
          _
        $region78: #{tpu_custom_call.1} parent=35 // pred_check_branch
          %366 = sbr.rel target = $region80
        $region79: #{tpu_custom_call.1} parent=35 // pred_region
          %367 = sst [smem:[#allocation17]] [#allocation30]
          %368 = sst [smem:[#allocation18]] [#allocation29]
        $region80: #{tpu_custom_call.1} parent=35 // pred_fallthru
          _
        %370 = shalt.err (0)
        %s372 = sshll.u32 %s363, 4
        %s373 = int_to_ptr.vmem [resolvable:$true] %s372
        %375 = dma.hbm_to_vmem [thread:$0]  %s362, 16, %s373, %s364
        %s376 = sadd.s32 %s259, 7
        %s377 = sld [smem:[#allocation5 + %s376]]
        %s378 = smul.addr %s377, 16
        %s379 = scalar_lea.hbm %s2, %s378
        %s380 = scalar_lea.vmem [#allocation2], 7
        %s381 = scalar_lea.sflag [#allocation3], 7
        // Predicated region
        $region81: #{tpu_custom_call.1} parent=35 // pred_check
          _
        $region82: #{tpu_custom_call.1} parent=35 // pred_check_branch
          %383 = sbr.rel target = $region84
        $region83: #{tpu_custom_call.1} parent=35 // pred_region
          %384 = sst [smem:[#allocation17]] [#allocation32]
          %385 = sst [smem:[#allocation18]] [#allocation31]
        $region84: #{tpu_custom_call.1} parent=35 // pred_fallthru
          _
        %387 = shalt.err (0)
        %s389 = sshll.u32 %s380, 4
        %s390 = int_to_ptr.vmem [resolvable:$true] %s389
        %392 = dma.hbm_to_vmem [thread:$0]  %s379, 16, %s390, %s381
        loop: start=0, step=1, limit=8
        $region85: #{tpu_custom_call.1} parent=35 // loop_pre_header
          _
        $region86: #{tpu_custom_call.1} parent=35 // loop_header
          %s394 = sphi 0, %s398
          %p395 = scmp.ge.s32.totalorder %s394, 8
        $region87: #{tpu_custom_call.1} parent=35 // loop_header_branch
          %397 = sbr.rel (%p395) target = $region91
        $region88: #{tpu_custom_call.1} parent=35 // loop_body
          %s399 = sadd.s32 %s259, %s394
          %s400 = sld [smem:[#allocation5 + %s399]]
          %p401 = scmp.lt.s32.totalorder %s394, 0
          %s402 = ssub.s32 0, %s394
          %s403 = scalar_select %p401, %s402, %s394
          %s404 = sand.u32 %s403, 7
          %s405 = ssub.s32 0, %s404
          %s406 = scalar_select %p401, %s405, %s404
          %p407 = scmp.ne.s32.totalorder %s406, 0
          %p408 = scmp.lt.s32.totalorder %s406, 0
          %p409 = pnand %p408, %p407
          %p410 = pneg %p409
          %s411 = sadd.s32 %s406, 8
          %s412 = scalar_select %p410, %s411, %s406
          %s413 = scalar_lea.sflag [#allocation3], %s412
          %s414 = smul.u32 1, 1
          %s415 = sshll.u32 %s414, 4
          %416 = dma.done %s413, %s415
          %s417 = sadd.s32 %s394, 8
          %p418 = scmp.lt.s32.totalorder %s417, 8
          // Predicated region
          $region92: #{tpu_custom_call.1} parent=88 // pred_check
            %p419 = pneg %p418
          $region93: #{tpu_custom_call.1} parent=88 // pred_check_branch
            %421 = sbr.rel (%p419) target = $region95
          $region94: #{tpu_custom_call.1} parent=88 // pred_region
            %s422 = sadd.s32 %s259, %s417
            %s423 = sld [smem:[#allocation5 + %s422]]
            %p424 = scmp.lt.s32.totalorder %s417, 0
            %s425 = ssub.s32 0, %s417
            %s426 = scalar_select %p424, %s425, %s417
            %s427 = sand.u32 %s426, 7
            %s428 = ssub.s32 0, %s427
            %s429 = scalar_select %p424, %s428, %s427
            %p430 = scmp.ne.s32.totalorder %s429, 0
            %p431 = scmp.lt.s32.totalorder %s429, 0
            %p432 = pnand %p431, %p430
            %p433 = pneg %p432
            %s434 = sadd.s32 %s429, 8
            %s435 = scalar_select %p433, %s434, %s429
            %s436 = smul.addr %s423, 16
            %s437 = scalar_lea.hbm %s2, %s436
            %s438 = scalar_lea.vmem [#allocation2], %s417
            %s439 = scalar_lea.sflag [#allocation3], %s435
            // Predicated region
            $region96: #{tpu_custom_call.1} parent=94 // pred_check
              _
            $region97: #{tpu_custom_call.1} parent=94 // pred_check_branch
              %441 = sbr.rel target = $region99
            $region98: #{tpu_custom_call.1} parent=94 // pred_region
              %442 = sst [smem:[#allocation17]] [#allocation34]
              %443 = sst [smem:[#allocation18]] [#allocation33]
            $region99: #{tpu_custom_call.1} parent=94 // pred_fallthru
              _
            %445 = shalt.err (0)
            %s447 = sshll.u32 %s438, 4
            %s448 = int_to_ptr.vmem [resolvable:$true] %s447
            %450 = dma.hbm_to_vmem [thread:$0]  %s437, 16, %s448, %s439
          $region95: #{tpu_custom_call.1} parent=88 // pred_fallthru
            _
        $region89: #{tpu_custom_call.1} parent=35 // loop_footer
          %s398 = sadd.s32 1, %s394
        $region90: #{tpu_custom_call.1} parent=35 // loop_footer_branch
          %393 = sbr.rel target = $region86
        $region91: #{tpu_custom_call.1} parent=35 // loop_exit
          _
        %v451 = vld [vmem:[%s222] sm:$0xff]
        %v452 = vlaneseq
        %v453 = vand.u32 %v452, 127
        %v454 = vadd.s32 %v453, 128
        %v455 = vadd.s32 %v453, 256
        %v456 = vadd.s32 %v453, 384
        %v457 = vadd.s32 %v453, 512
        %458 = vset.pattern.permute.xlu0 2
        %459 = vperm.xlu0 %458, %v451
        %v460 = vpop.permute.xlu0 %459
        %vm461 = vcmp.eq.s32.totalorder %v453, %v460
        %vm462 = vcmp.eq.s32.totalorder %v454, %v460
        %vm463 = vcmp.eq.s32.totalorder %v455, %v460
        %vm464 = vcmp.eq.s32.totalorder %v456, %v460
        %vm465 = vcmp.eq.s32.totalorder %v457, %v460
        %v466 = vsel %vm461, 1, 0
        %v467 = vsel %vm462, 1, 0
        %v468 = vsel %vm463, 1, 0
        %v469 = vsel %vm464, 1, 0
        %v470 = vsel %vm465, 1, 0
        %v471 = vcvt.s32.f32 %v466
        %v472 = vcvt.s32.f32 %v467
        %v473 = vcvt.s32.f32 %v468
        %v474 = vcvt.s32.f32 %v469
        %v475 = vcvt.s32.f32 %v470
        %476 = vset.pattern.permute.xlu0 4
        %477 = vperm.xlu0 %476, %v451
        %v478 = vpop.permute.xlu0 %477
        %vm479 = vcmp.eq.s32.totalorder %v453, %v478
        %vm480 = vcmp.eq.s32.totalorder %v454, %v478
        %vm481 = vcmp.eq.s32.totalorder %v455, %v478
        %vm482 = vcmp.eq.s32.totalorder %v456, %v478
        %vm483 = vcmp.eq.s32.totalorder %v457, %v478
        %v484 = vsel %vm479, 1, 0
        %v485 = vsel %vm480, 1, 0
        %v486 = vsel %vm481, 1, 0
        %v487 = vsel %vm482, 1, 0
        %v488 = vsel %vm483, 1, 0
        %v489 = vcvt.s32.f32 %v484
        %v490 = vcvt.s32.f32 %v485
        %v491 = vcvt.s32.f32 %v486
        %v492 = vcvt.s32.f32 %v487
        %v493 = vcvt.s32.f32 %v488
        %v494 = vadd.f32 %v471, %v489
        %v495 = vadd.f32 %v472, %v490
        %v496 = vadd.f32 %v473, %v491
        %v497 = vadd.f32 %v474, %v492
        %v498 = vadd.f32 %v475, %v493
        %v499 = vadd.s32 %v451, 128
        %500 = vset.pattern.permute.xlu0 3
        %501 = vperm.xlu0 %500, %v499
        %v502 = vpop.permute.xlu0 %501
        %vm503 = vcmp.eq.s32.totalorder %v453, %v502
        %vm504 = vcmp.eq.s32.totalorder %v454, %v502
        %vm505 = vcmp.eq.s32.totalorder %v455, %v502
        %vm506 = vcmp.eq.s32.totalorder %v456, %v502
        %vm507 = vcmp.eq.s32.totalorder %v457, %v502
        %v508 = vsel %vm503, 1, 0
        %v509 = vsel %vm504, 1, 0
        %v510 = vsel %vm505, 1, 0
        %v511 = vsel %vm506, 1, 0
        %v512 = vsel %vm507, 1, 0
        %v513 = vcvt.s32.f32 %v508
        %v514 = vcvt.s32.f32 %v509
        %v515 = vcvt.s32.f32 %v510
        %v516 = vcvt.s32.f32 %v511
        %v517 = vcvt.s32.f32 %v512
        %v518 = vadd.f32 %v494, %v513
        %v519 = vadd.f32 %v495, %v514
        %v520 = vadd.f32 %v496, %v515
        %v521 = vadd.f32 %v497, %v516
        %v522 = vadd.f32 %v498, %v517
        %523 = vset.pattern.permute.xlu0 5
        %524 = vperm.xlu0 %523, %v499
        %v525 = vpop.permute.xlu0 %524
        %vm526 = vcmp.eq.s32.totalorder %v453, %v525
        %vm527 = vcmp.eq.s32.totalorder %v454, %v525
        %vm528 = vcmp.eq.s32.totalorder %v455, %v525
        %vm529 = vcmp.eq.s32.totalorder %v456, %v525
        %vm530 = vcmp.eq.s32.totalorder %v457, %v525
        %v531 = vsel %vm526, 1, 0
        %v532 = vsel %vm527, 1, 0
        %v533 = vsel %vm528, 1, 0
        %v534 = vsel %vm529, 1, 0
        %v535 = vsel %vm530, 1, 0
        %v536 = vcvt.s32.f32 %v531
        %v537 = vcvt.s32.f32 %v532
        %v538 = vcvt.s32.f32 %v533
        %v539 = vcvt.s32.f32 %v534
        %v540 = vcvt.s32.f32 %v535
        %v541 = vadd.f32 %v518, %v536
        %v542 = vadd.f32 %v519, %v537
        %v543 = vadd.f32 %v520, %v538
        %v544 = vadd.f32 %v521, %v539
        %v545 = vadd.f32 %v522, %v540
        %546 = vrot.lane.b32.xlu0 %v451, 2
        %v547 = vpop.permute.xlu0 %546
        %v548 = vsub.s32 %v451, %v547
        %v549 = vadd.s32 %v548, 256
        %550 = vset.pattern.permute.xlu0 5
        %551 = vperm.xlu0 %550, %v549
        %v552 = vpop.permute.xlu0 %551
        %vm553 = vcmp.eq.s32.totalorder %v453, %v552
        %vm554 = vcmp.eq.s32.totalorder %v454, %v552
        %vm555 = vcmp.eq.s32.totalorder %v455, %v552
        %vm556 = vcmp.eq.s32.totalorder %v456, %v552
        %vm557 = vcmp.eq.s32.totalorder %v457, %v552
        %v558 = vsel %vm553, 1, 0
        %v559 = vsel %vm554, 1, 0
        %v560 = vsel %vm555, 1, 0
        %v561 = vsel %vm556, 1, 0
        %v562 = vsel %vm557, 1, 0
        %v563 = vcvt.s32.f32 %v558
        %v564 = vcvt.s32.f32 %v559
        %v565 = vcvt.s32.f32 %v560
        %v566 = vcvt.s32.f32 %v561
        %v567 = vcvt.s32.f32 %v562
        %v568 = vadd.f32 %v541, %v563
        %v569 = vadd.f32 %v542, %v564
        %v570 = vadd.f32 %v543, %v565
        %v571 = vadd.f32 %v544, %v566
        %v572 = vadd.f32 %v545, %v567
        %v573 = vadd.s32 %v548, 384
        %574 = vset.pattern.permute.xlu0 4
        %575 = vperm.xlu0 %574, %v573
        %v576 = vpop.permute.xlu0 %575
        %vm577 = vcmp.eq.s32.totalorder %v453, %v576
        %vm578 = vcmp.eq.s32.totalorder %v454, %v576
        %vm579 = vcmp.eq.s32.totalorder %v455, %v576
        %vm580 = vcmp.eq.s32.totalorder %v456, %v576
        %vm581 = vcmp.eq.s32.totalorder %v457, %v576
        %v582 = vsel %vm577, 1, 0
        %v583 = vsel %vm578, 1, 0
        %v584 = vsel %vm579, 1, 0
        %v585 = vsel %vm580, 1, 0
        %v586 = vsel %vm581, 1, 0
        %v587 = vcvt.s32.f32 %v582
        %v588 = vcvt.s32.f32 %v583
        %v589 = vcvt.s32.f32 %v584
        %v590 = vcvt.s32.f32 %v585
        %v591 = vcvt.s32.f32 %v586
        %v592 = vadd.f32 %v568, %v587
        %v593 = vadd.f32 %v569, %v588
        %v594 = vadd.f32 %v570, %v589
        %v595 = vadd.f32 %v571, %v590
        %v596 = vadd.f32 %v572, %v591
        %v597 = vadd.s32 %v451, 512
        %598 = vset.pattern.permute.xlu0 0
        %599 = vperm.xlu0 %598, %v597
        %v600 = vpop.permute.xlu0 %599
        %vm601 = vcmp.eq.s32.totalorder %v453, %v600
        %vm602 = vcmp.eq.s32.totalorder %v454, %v600
        %vm603 = vcmp.eq.s32.totalorder %v455, %v600
        %vm604 = vcmp.eq.s32.totalorder %v456, %v600
        %vm605 = vcmp.eq.s32.totalorder %v457, %v600
        %v606 = vsel %vm601, 1, 0
        %v607 = vsel %vm602, 1, 0
        %v608 = vsel %vm603, 1, 0
        %v609 = vsel %vm604, 1, 0
        %v610 = vsel %vm605, 1, 0
        %v611 = vcvt.s32.f32 %v606
        %v612 = vcvt.s32.f32 %v607
        %v613 = vcvt.s32.f32 %v608
        %v614 = vcvt.s32.f32 %v609
        %v615 = vcvt.s32.f32 %v610
        %v616 = vadd.f32 %v592, %v611
        %v617 = vadd.f32 %v593, %v612
        %v618 = vadd.f32 %v594, %v613
        %v619 = vadd.f32 %v595, %v614
        %v620 = vadd.f32 %v596, %v615
        %v621 = vadd.s32 %v451, 528
        %622 = vset.pattern.permute.xlu0 1
        %623 = vperm.xlu0 %622, %v621
        %v624 = vpop.permute.xlu0 %623
        %vm625 = vcmp.eq.s32.totalorder %v453, %v624
        %vm626 = vcmp.eq.s32.totalorder %v454, %v624
        %vm627 = vcmp.eq.s32.totalorder %v455, %v624
        %vm628 = vcmp.eq.s32.totalorder %v456, %v624
        %vm629 = vcmp.eq.s32.totalorder %v457, %v624
        %v630 = vsel %vm625, 1, 0
        %v631 = vsel %vm626, 1, 0
        %v632 = vsel %vm627, 1, 0
        %v633 = vsel %vm628, 1, 0
        %v634 = vsel %vm629, 1, 0
        %v635 = vcvt.s32.f32 %v630
        %v636 = vcvt.s32.f32 %v631
        %v637 = vcvt.s32.f32 %v632
        %v638 = vcvt.s32.f32 %v633
        %v639 = vcvt.s32.f32 %v634
        %v640 = vadd.f32 %v616, %v635
        %v641 = vadd.f32 %v617, %v636
        %v642 = vadd.f32 %v618, %v637
        %v643 = vadd.f32 %v619, %v638
        %v644 = vadd.f32 %v620, %v639
        %v645 = vld [vmem:[#allocation9] sm:$0xff]
        %v646 = vld [vmem:[#allocation9 + $0x8] sm:$0xff]
        %v647 = vld [vmem:[#allocation9 + $0x10] sm:$0xff]
        %v648 = vld [vmem:[#allocation9 + $0x18] sm:$0xff]
        %v649 = vld [vmem:[#allocation9 + $0x20] sm:$0xff]
        %v650 = vld [vmem:[#allocation9 + $0x28] sm:$0xff]
        %v651 = vld [vmem:[#allocation9 + $0x30] sm:$0xff]
        %v652 = vld [vmem:[#allocation9 + $0x38] sm:$0xff]
        %v653 = vld [vmem:[#allocation9 + $0x40] sm:$0xff]
        %v654 = vld [vmem:[#allocation9 + $0x48] sm:$0xff]
        %v655 = vld [vmem:[#allocation9 + $0x50] sm:$0xff]
        %v656 = vld [vmem:[#allocation9 + $0x58] sm:$0xff]
        %v657 = vld [vmem:[#allocation9 + $0x60] sm:$0xff]
        %v658 = vld [vmem:[#allocation9 + $0x68] sm:$0xff]
        %v659 = vld [vmem:[#allocation9 + $0x70] sm:$0xff]
        %v660 = vld [vmem:[#allocation9 + $0x78] sm:$0xff]
        %v661 = vld [vmem:[#allocation9 + $0x80] sm:$0xff]
        %v662 = vld [vmem:[#allocation9 + $0x88] sm:$0xff]
        %v663 = vld [vmem:[#allocation9 + $0x90] sm:$0xff]
        %v664 = vld [vmem:[#allocation9 + $0x98] sm:$0xff]
        %v665 = vld [vmem:[#allocation9 + $0xa0] sm:$0xff]
        %v666 = vld [vmem:[#allocation9 + $0xa8] sm:$0xff]
        %v667 = vld [vmem:[#allocation9 + $0xb0] sm:$0xff]
        %v668 = vld [vmem:[#allocation9 + $0xb8] sm:$0xff]
        %v669 = vld [vmem:[#allocation9 + $0xc0] sm:$0xff]
        %v670 = vld [vmem:[#allocation9 + $0xc8] sm:$0xff]
        %v671 = vld [vmem:[#allocation9 + $0xd0] sm:$0xff]
        %v672 = vld [vmem:[#allocation9 + $0xd8] sm:$0xff]
        %v673 = vld [vmem:[#allocation9 + $0xe0] sm:$0xff]
        %v674 = vld [vmem:[#allocation9 + $0xe8] sm:$0xff]
        %v675 = vld [vmem:[#allocation9 + $0xf0] sm:$0xff]
        %v676 = vld [vmem:[#allocation9 + $0xf8] sm:$0xff]
        %v677 = vld [vmem:[#allocation9 + $0x100] sm:$0xff]
        %v678 = vld [vmem:[#allocation9 + $0x108] sm:$0xff]
        %v679 = vld [vmem:[#allocation9 + $0x110] sm:$0xff]
        %v680 = vld [vmem:[#allocation9 + $0x118] sm:$0xff]
        %v681 = vld [vmem:[#allocation9 + $0x120] sm:$0xff]
        %v682 = vld [vmem:[#allocation9 + $0x128] sm:$0xff]
        %v683 = vld [vmem:[#allocation9 + $0x130] sm:$0xff]
        %v684 = vld [vmem:[#allocation9 + $0x138] sm:$0xff]
        %v685 = vld [vmem:[#allocation9 + $0x140] sm:$0xff]
        %v686 = vld [vmem:[#allocation9 + $0x148] sm:$0xff]
        %v687 = vld [vmem:[#allocation9 + $0x150] sm:$0xff]
        %v688 = vld [vmem:[#allocation9 + $0x158] sm:$0xff]
        %v689 = vld [vmem:[#allocation9 + $0x160] sm:$0xff]
        %v690 = vld [vmem:[#allocation9 + $0x168] sm:$0xff]
        %v691 = vld [vmem:[#allocation9 + $0x170] sm:$0xff]
        %v692 = vld [vmem:[#allocation9 + $0x178] sm:$0xff]
        %v693 = vld [vmem:[#allocation9 + $0x180] sm:$0xff]
        %v694 = vld [vmem:[#allocation9 + $0x188] sm:$0xff]
        %v695 = vld [vmem:[#allocation9 + $0x190] sm:$0xff]
        %v696 = vld [vmem:[#allocation9 + $0x198] sm:$0xff]
        %v697 = vld [vmem:[#allocation9 + $0x1a0] sm:$0xff]
        %v698 = vld [vmem:[#allocation9 + $0x1a8] sm:$0xff]
        %v699 = vld [vmem:[#allocation9 + $0x1b0] sm:$0xff]
        %v700 = vld [vmem:[#allocation9 + $0x1b8] sm:$0xff]
        %v701 = vld [vmem:[#allocation9 + $0x1c0] sm:$0xff]
        %v702 = vld [vmem:[#allocation9 + $0x1c8] sm:$0xff]
        %v703 = vld [vmem:[#allocation9 + $0x1d0] sm:$0xff]
        %v704 = vld [vmem:[#allocation9 + $0x1d8] sm:$0xff]
        %v705 = vld [vmem:[#allocation9 + $0x1e0] sm:$0xff]
        %v706 = vld [vmem:[#allocation9 + $0x1e8] sm:$0xff]
        %v707 = vld [vmem:[#allocation9 + $0x1f0] sm:$0xff]
        %v708 = vld [vmem:[#allocation9 + $0x1f8] sm:$0xff]
        %v709 = vld [vmem:[#allocation9 + $0x200] sm:$0xff]
        %v710 = vld [vmem:[#allocation9 + $0x208] sm:$0xff]
        %v711 = vld [vmem:[#allocation9 + $0x210] sm:$0xff]
        %v712 = vld [vmem:[#allocation9 + $0x218] sm:$0xff]
        %v713 = vld [vmem:[#allocation9 + $0x220] sm:$0xff]
        %v714 = vld [vmem:[#allocation9 + $0x228] sm:$0xff]
        %v715 = vld [vmem:[#allocation9 + $0x230] sm:$0xff]
        %v716 = vld [vmem:[#allocation9 + $0x238] sm:$0xff]
        %v717 = vld [vmem:[#allocation9 + $0x240] sm:$0xff]
        %v718 = vld [vmem:[#allocation9 + $0x248] sm:$0xff]
        %v719 = vld [vmem:[#allocation9 + $0x250] sm:$0xff]
        %v720 = vld [vmem:[#allocation9 + $0x258] sm:$0xff]
        %v721 = vld [vmem:[#allocation9 + $0x260] sm:$0xff]
        %v722 = vld [vmem:[#allocation9 + $0x268] sm:$0xff]
        %v723 = vld [vmem:[#allocation9 + $0x270] sm:$0xff]
        %v724 = vld [vmem:[#allocation9 + $0x278] sm:$0xff]
        %v725 = vld [vmem:[#allocation2] sm:$0xff]
        %726 = vmatprep.subr.mxu0 0.0
        %727 = vmatpush1.msra.mxu0 %v645
        %728 = vmatprep.subr.mxu0 0.0
        %729 = vmatpush1.msra.mxu0 %v646
        %730 = vmatprep.subr.mxu0 0.0
        %731 = vmatpush1.msra.mxu0 %v647
        %732 = vmatprep.subr.mxu0 0.0
        %733 = vmatpush1.msra.mxu0 %v648
        %734 = vmatprep.subr.mxu0 0.0
        %735 = vmatpush1.msra.mxu0 %v649
        %736 = vmatprep.subr.mxu0 0.0
        %737 = vmatpush1.msra.mxu0 %v650
        %738 = vmatprep.subr.mxu0 0.0
        %739 = vmatpush1.msra.mxu0 %v651
        %740 = vmatprep.subr.mxu0 0.0
        %741 = vmatpush1.msra.mxu0 %v652
        %742 = vmatprep.subr.mxu0 0.0
        %743 = vmatpush1.msra.mxu0 %v653
        %744 = vmatprep.subr.mxu0 0.0
        %745 = vmatpush1.msra.mxu0 %v654
        %746 = vmatprep.subr.mxu0 0.0
        %747 = vmatpush1.msra.mxu0 %v655
        %748 = vmatprep.subr.mxu0 0.0
        %749 = vmatpush1.msra.mxu0 %v656
        %750 = vmatprep.subr.mxu0 0.0
        %751 = vmatpush1.msra.mxu0 %v657
        %752 = vmatprep.subr.mxu0 0.0
        %753 = vmatpush1.msra.mxu0 %v658
        %754 = vmatprep.subr.mxu0 0.0
        %755 = vmatpush1.msra.mxu0 %v659
        %756 = vmatprep.subr.mxu0 0.0
        %757 = vmatpush1.msra.mxu0 %v660
        %758 = vmatprep.subr.mxu0 0.0
        %759 = vmatpush1.msra.mxu0 %v661
        %760 = vmatprep.subr.mxu0 0.0
        %761 = vmatpush1.msra.mxu0 %v662
        %762 = vmatprep.subr.mxu0 0.0
        %763 = vmatpush1.msra.mxu0 %v663
        %764 = vmatprep.subr.mxu0 0.0
        %765 = vmatpush1.msra.mxu0 %v664
        %766 = vmatprep.subr.mxu0 0.0
        %767 = vmatpush1.msra.mxu0 %v665
        %768 = vmatprep.subr.mxu0 0.0
        %769 = vmatpush1.msra.mxu0 %v666
        %770 = vmatprep.subr.mxu0 0.0
        %771 = vmatpush1.msra.mxu0 %v667
        %772 = vmatprep.subr.mxu0 0.0
        %773 = vmatpush1.msra.mxu0 %v668
        %774 = vmatprep.subr.mxu0 0.0
        %775 = vmatpush1.msra.mxu0 %v669
        %776 = vmatprep.subr.mxu0 0.0
        %777 = vmatpush1.msra.mxu0 %v670
        %778 = vmatprep.subr.mxu0 0.0
        %779 = vmatpush1.msra.mxu0 %v671
        %780 = vmatprep.subr.mxu0 0.0
        %781 = vmatpush1.msra.mxu0 %v672
        %782 = vmatprep.subr.mxu0 0.0
        %783 = vmatpush1.msra.mxu0 %v673
        %784 = vmatprep.subr.mxu0 0.0
        %785 = vmatpush1.msra.mxu0 %v674
        %786 = vmatprep.subr.mxu0 0.0
        %787 = vmatpush1.msra.mxu0 %v675
        %788 = vmatprep.subr.mxu0 0.0
        %789 = vmatpush1.msra.mxu0 %v676
        %790 = vmatprep.mubr.f32.mxu0 %v641
        %791 = vmatmul.mubr.f32.gmra.mrb[0].mxu0 %v640
        %v792 = vpop.f32.mrb[0].mxu0
        %v793 = vadd.f32 %v725, %v792
        %v794 = vpop.f32.mrb[0].mxu0
        %795 = vdwg.mxu0
        %796 = vmatprep.subr.mxu0 0.0
        %797 = vmatpush1.msra.mxu0 %v677
        %798 = vmatprep.subr.mxu0 0.0
        %799 = vmatpush1.msra.mxu0 %v678
        %800 = vmatprep.subr.mxu0 0.0
        %801 = vmatpush1.msra.mxu0 %v679
        %802 = vmatprep.subr.mxu0 0.0
        %803 = vmatpush1.msra.mxu0 %v680
        %804 = vmatprep.subr.mxu0 0.0
        %805 = vmatpush1.msra.mxu0 %v681
        %806 = vmatprep.subr.mxu0 0.0
        %807 = vmatpush1.msra.mxu0 %v682
        %808 = vmatprep.subr.mxu0 0.0
        %809 = vmatpush1.msra.mxu0 %v683
        %810 = vmatprep.subr.mxu0 0.0
        %811 = vmatpush1.msra.mxu0 %v684
        %812 = vmatprep.subr.mxu0 0.0
        %813 = vmatpush1.msra.mxu0 %v685
        %814 = vmatprep.subr.mxu0 0.0
        %815 = vmatpush1.msra.mxu0 %v686
        %816 = vmatprep.subr.mxu0 0.0
        %817 = vmatpush1.msra.mxu0 %v687
        %818 = vmatprep.subr.mxu0 0.0
        %819 = vmatpush1.msra.mxu0 %v688
        %820 = vmatprep.subr.mxu0 0.0
        %821 = vmatpush1.msra.mxu0 %v689
        %822 = vmatprep.subr.mxu0 0.0
        %823 = vmatpush1.msra.mxu0 %v690
        %824 = vmatprep.subr.mxu0 0.0
        %825 = vmatpush1.msra.mxu0 %v691
        %826 = vmatprep.subr.mxu0 0.0
        %827 = vmatpush1.msra.mxu0 %v692
        %828 = vmatprep.subr.mxu0 0.0
        %829 = vmatpush1.msra.mxu0 %v693
        %830 = vmatprep.subr.mxu0 0.0
        %831 = vmatpush1.msra.mxu0 %v694
        %832 = vmatprep.subr.mxu0 0.0
        %833 = vmatpush1.msra.mxu0 %v695
        %834 = vmatprep.subr.mxu0 0.0
        %835 = vmatpush1.msra.mxu0 %v696
        %836 = vmatprep.subr.mxu0 0.0
        %837 = vmatpush1.msra.mxu0 %v697
        %838 = vmatprep.subr.mxu0 0.0
        %839 = vmatpush1.msra.mxu0 %v698
        %840 = vmatprep.subr.mxu0 0.0
        %841 = vmatpush1.msra.mxu0 %v699
        %842 = vmatprep.subr.mxu0 0.0
        %843 = vmatpush1.msra.mxu0 %v700
        %844 = vmatprep.subr.mxu0 0.0
        %845 = vmatpush1.msra.mxu0 %v701
        %846 = vmatprep.subr.mxu0 0.0
        %847 = vmatpush1.msra.mxu0 %v702
        %848 = vmatprep.subr.mxu0 0.0
        %849 = vmatpush1.msra.mxu0 %v703
        %850 = vmatprep.subr.mxu0 0.0
        %851 = vmatpush1.msra.mxu0 %v704
        %852 = vmatprep.subr.mxu0 0.0
        %853 = vmatpush1.msra.mxu0 %v705
        %854 = vmatprep.subr.mxu0 0.0
        %855 = vmatpush1.msra.mxu0 %v706
        %856 = vmatprep.subr.mxu0 0.0
        %857 = vmatpush1.msra.mxu0 %v707
        %858 = vmatprep.subr.mxu0 0.0
        %859 = vmatpush1.msra.mxu0 %v708
        %860 = vmatprep.mubr.f32.mxu0 %v643
        %861 = vmatmul.mubr.f32.gmra.mrb[0].mxu0 %v642
        %v862 = vpop.f32.mrb[0].mxu0
        %v863 = vadd.f32 %v793, %v862
        %v864 = vpop.f32.mrb[0].mxu0
        %865 = vdwg.mxu0
        %866 = vmatprep.subr.mxu0 0.0
        %867 = vmatpush1.msra.mxu0 %v709
        %868 = vmatprep.subr.mxu0 0.0
        %869 = vmatpush1.msra.mxu0 %v710
        %870 = vmatprep.subr.mxu0 0.0
        %871 = vmatpush1.msra.mxu0 %v711
        %872 = vmatprep.subr.mxu0 0.0
        %873 = vmatpush1.msra.mxu0 %v712
        %874 = vmatprep.subr.mxu0 0.0
        %875 = vmatpush1.msra.mxu0 %v713
        %876 = vmatprep.subr.mxu0 0.0
        %877 = vmatpush1.msra.mxu0 %v714
        %878 = vmatprep.subr.mxu0 0.0
        %879 = vmatpush1.msra.mxu0 %v715
        %880 = vmatprep.subr.mxu0 0.0
        %881 = vmatpush1.msra.mxu0 %v716
        %882 = vmatprep.subr.mxu0 0.0
        %883 = vmatpush1.msra.mxu0 %v717
        %884 = vmatprep.subr.mxu0 0.0
        %885 = vmatpush1.msra.mxu0 %v718
        %886 = vmatprep.subr.mxu0 0.0
        %887 = vmatpush1.msra.mxu0 %v719
        %888 = vmatprep.subr.mxu0 0.0
        %889 = vmatpush1.msra.mxu0 %v720
        %890 = vmatprep.subr.mxu0 0.0
        %891 = vmatpush1.msra.mxu0 %v721
        %892 = vmatprep.subr.mxu0 0.0
        %893 = vmatpush1.msra.mxu0 %v722
        %894 = vmatprep.subr.mxu0 0.0
        %895 = vmatpush1.msra.mxu0 %v723
        %896 = vmatprep.subr.mxu0 0.0
        %897 = vmatpush1.msra.mxu0 %v724
        %898 = vmatprep.subr.mxu0 0.0
        %899 = vmatpush1.msra.mxu0 0.0
        %900 = vmatprep.subr.mxu0 0.0
        %901 = vmatpush1.msra.mxu0 0.0
        %902 = vmatprep.subr.mxu0 0.0
        %903 = vmatpush1.msra.mxu0 0.0
        %904 = vmatprep.subr.mxu0 0.0
        %905 = vmatpush1.msra.mxu0 0.0
        %906 = vmatprep.subr.mxu0 0.0
        %907 = vmatpush1.msra.mxu0 0.0
        %908 = vmatprep.subr.mxu0 0.0
        %909 = vmatpush1.msra.mxu0 0.0
        %910 = vmatprep.subr.mxu0 0.0
        %911 = vmatpush1.msra.mxu0 0.0
        %912 = vmatprep.subr.mxu0 0.0
        %913 = vmatpush1.msra.mxu0 0.0
        %914 = vmatprep.subr.mxu0 0.0
        %915 = vmatpush1.msra.mxu0 0.0
        %916 = vmatprep.subr.mxu0 0.0
        %917 = vmatpush1.msra.mxu0 0.0
        %918 = vmatprep.subr.mxu0 0.0
        %919 = vmatpush1.msra.mxu0 0.0
        %920 = vmatprep.subr.mxu0 0.0
        %921 = vmatpush1.msra.mxu0 0.0
        %922 = vmatprep.subr.mxu0 0.0
        %923 = vmatpush1.msra.mxu0 0.0
        %924 = vmatprep.subr.mxu0 0.0
        %925 = vmatpush1.msra.mxu0 0.0
        %926 = vmatprep.subr.mxu0 0.0
        %927 = vmatpush1.msra.mxu0 0.0
        %928 = vmatprep.subr.mxu0 0.0
        %929 = vmatpush1.msra.mxu0 0.0
        %930 = vmatprep.mubr.f32.mxu0 0.0
        %931 = vmatmul.mubr.f32.gmra.mrb[0].mxu0 %v644
        %v932 = vpop.f32.mrb[0].mxu0
        %v933 = vadd.f32 %v863, %v932
        %v934 = vpop.f32.mrb[0].mxu0
        %935 = vdwg.mxu0
        %vm936 = vcmask 261120
        %v937 = vsel %vm936, %v933, 0.0
        %938 = vadd.xlane.f32.xlu0 %v937
        %v939 = vpop.xlane.xlu0 %938
        %v940 = vmul.f32 %v939, 0.03125
        %v941 = vsub.f32 %v933, %v940
        %v942 = vmul.f32 %v941, %v941
        %v943 = vsel %vm936, %v942, 0.0
        %944 = vadd.xlane.f32.xlu0 %v943
        %v945 = vpop.xlane.xlu0 %944
        %v946 = vmul.f32 %v945, 0.03125
        %v947 = vadd.f32 %v946, 1e-12
        %v948 = vrsqrt.pop %v947
        %v949 = vmul.f32 %v941, %v948
        %v950 = vld [vmem:[#allocation11] sm:$0x1]
        %v952 = vlaneseq
        %v953 = vshrl.u32 %v952, 7
        %v954 = vsub.s32 0, %v953
        %v955 = vrot.slane %v950, %v954
        %v957 = vmul.f32 %v949, %v955
        %v958 = vld [vmem:[#allocation12] sm:$0x1]
        %v960 = vlaneseq
        %v961 = vshrl.u32 %v960, 7
        %v962 = vsub.s32 0, %v961
        %v963 = vrot.slane %v958, %v962
        %v965 = vadd.f32 %v957, %v963
        %966 = vst.msk [vmem:[%s258] sm:$0xff] %vm936, %v965
        %s967 = sand.u32 %s126, 1
        %s968 = scalar_lea.sflag [#allocation8], %s967
        %s969 = sand.u32 %s126, 1
        %s970 = smul.addr %s969, 8
        %s971 = scalar_lea.vmem [#allocation14], %s970
        // Predicated region
        $region100: #{tpu_custom_call.1} parent=35 // pred_check
          %p972 = pneg %p136
        $region101: #{tpu_custom_call.1} parent=35 // pred_check_branch
          %974 = sbr.rel (%p972) target = $region103
        $region102: #{tpu_custom_call.1} parent=35 // pred_region
          %s976 = ssub.s32 128, 128
          %977 = vsyncadd %s968, %s976
          %s978 = smul.addr %s29, 128
          %s979 = scalar_lea.hbm %s6, %s978
          %s981 = sshll.u32 %s971, 4
          %s982 = int_to_ptr.vmem [resolvable:$true] %s981
          %984 = dma.vmem_to_hbm [thread:$0]  %s982, 128, %s979, %s968
        $region103: #{tpu_custom_call.1} parent=35 // pred_fallthru
          _
      $region36: #{tpu_custom_call.1} parent=5 // pred_fallthru
        _
      %p985 = scmp.le.s32.totalorder 2, %s24
      // Predicated region
      $region104: #{tpu_custom_call.1} parent=5 // pred_check
        %p986 = pneg %p985
      $region105: #{tpu_custom_call.1} parent=5 // pred_check_branch
        %988 = sbr.rel (%p986) target = $region107
      $region106: #{tpu_custom_call.1} parent=5 // pred_region
        %s989 = ssub.s32 %s24, 2
        // Predicated region
        $region108: #{tpu_custom_call.1} parent=106 // pred_check
          %p990 = pneg %p142
        $region109: #{tpu_custom_call.1} parent=106 // pred_check_branch
          %992 = sbr.rel (%p990) target = $region111
        $region110: #{tpu_custom_call.1} parent=106 // pred_region
          %s993 = sand.u32 %s127, 1
          %s994 = scalar_lea.sflag [#allocation8], %s993
          %s995 = sand.u32 %s127, 1
          %s996 = smul.addr %s995, 8
          %s997 = scalar_lea.vmem [#allocation14], %s996
          %998 = dma.done %s994, 128
        $region111: #{tpu_custom_call.1} parent=106 // pred_fallthru
          _
      $region107: #{tpu_custom_call.1} parent=5 // pred_fallthru
        _
    $region6: #{tpu_custom_call.1} parent=1 // loop_footer
      %s28 = sadd.s32 1, %s24
    $region7: #{tpu_custom_call.1} parent=1 // loop_footer_branch
      %23 = sbr.rel target = $region3
    $region8: #{tpu_custom_call.1} parent=1 // loop_exit
      _
    %999 = vsyncpa [#allocation7], 1
    %s1000 = scalar_lea.sflag [#allocation7], 1
    %1001 = vsyncpa %s1000, 1
    %1002 = vsyncpa [#allocation10], 1
    %1003 = vsyncpa [#allocation13], 1
    %1004 = vsyncpa [#allocation8], 1
    %s1005 = scalar_lea.sflag [#allocation8], 1
    %1006 = vsyncpa %s1005, 1
  %1007 = vsyncmov [#allocation3]
  %s1008 = vpop.sfrf %1007
  %p1009 = scmp.eq.s32.totalorder %s1008, 0
  %p1010 = pneg %p1009
  %1012 = shalt.err (%p1010)
  %s1013 = scalar_lea.sflag [#allocation3], 1
  %1014 = vsyncmov %s1013
  %s1015 = vpop.sfrf %1014
  %p1016 = scmp.eq.s32.totalorder %s1015, 0
  %p1017 = pneg %p1016
  %1019 = shalt.err (%p1017)
  %s1020 = scalar_lea.sflag [#allocation3], 2
  %1021 = vsyncmov %s1020
  %s1022 = vpop.sfrf %1021
  %p1023 = scmp.eq.s32.totalorder %s1022, 0
  %p1024 = pneg %p1023
  %1026 = shalt.err (%p1024)
  %s1027 = scalar_lea.sflag [#allocation3], 3
  %1028 = vsyncmov %s1027
  %s1029 = vpop.sfrf %1028
  %p1030 = scmp.eq.s32.totalorder %s1029, 0
  %p1031 = pneg %p1030
  %1033 = shalt.err (%p1031)
  %s1034 = scalar_lea.sflag [#allocation3], 4
  %1035 = vsyncmov %s1034
  %s1036 = vpop.sfrf %1035
  %p1037 = scmp.eq.s32.totalorder %s1036, 0
  %p1038 = pneg %p1037
  %1040 = shalt.err (%p1038)
  %s1041 = scalar_lea.sflag [#allocation3], 5
  %1042 = vsyncmov %s1041
  %s1043 = vpop.sfrf %1042
  %p1044 = scmp.eq.s32.totalorder %s1043, 0
  %p1045 = pneg %p1044
  %1047 = shalt.err (%p1045)
  %s1048 = scalar_lea.sflag [#allocation3], 6
  %1049 = vsyncmov %s1048
  %s1050 = vpop.sfrf %1049
  %p1051 = scmp.eq.s32.totalorder %s1050, 0
  %p1052 = pneg %p1051
  %1054 = shalt.err (%p1052)
  %s1055 = scalar_lea.sflag [#allocation3], 7
  %1056 = vsyncmov %s1055
  %s1057 = vpop.sfrf %1056
  %p1058 = scmp.eq.s32.totalorder %s1057, 0
  %p1059 = pneg %p1058
  %1061 = shalt.err (%p1059)

</llo_original>
